<compile_context>
chip_gen: v6e
topology: v6e:2x2x1
jax: 0.10.0
libtpu: 0.0.40
codegen_flags: <defaults>
</compile_context>

<pallas_src>
import jax
import jax.numpy as jnp
from jax import lax
from jax.experimental import pallas as pl
from jax.experimental.pallas import tpu as pltpu

MAX_REL = 32                        # max_relative_feature
NUM_CLASSES = 2 * MAX_REL + 2       # 66 (one_hot width)
C_PAD = 128                         # classes zero-padded to a full lane width for the MXU
NUM_EMB = 16                        # num_embeddings
GROUP = 8                           # rows packed per 128-wide output row (8 * 16 = 128)
TILE_M_DEFAULT = 4096               # flattened rows per grid step; sweep 2048-8192


def pos_enc_kernel(off_ref, msk_ref, w_ref, out_ref):
    off = off_ref[...]              # (tile_r, 8) int32
    msk = msk_ref[...]              # (tile_r, 8) int32

    # d = clip(offset + max_rel, 0, 2*max_rel) * mask + (1 - mask) * (2*max_rel + 1)
    d = jnp.clip(off + MAX_REL, 0, 2 * MAX_REL) * msk + (1 - msk) * (2 * MAX_REL + 1)

    tile_r = off.shape[0]
    lane_iota = lax.broadcasted_iota(jnp.int32, (tile_r, C_PAD), 1)

    # Lane-dense one-hot: segment j (lanes [128j, 128j+128)) holds one_hot(d[:, j], 128).
    # Each segment is a full-vreg-width compare; concat at 128-lane boundaries is cheap.
    pieces = [(d[:, j:j + 1] == lane_iota).astype(jnp.float32) for j in range(GROUP)]
    onehot = jnp.concatenate(pieces, axis=1)            # (tile_r, 1024)

    # One MXU matmul against the bias-folded block-diagonal (1024, 128) table.
    # Result block (tile_r, 128): full-lane, unmasked stores.
    out_ref[...] = jnp.dot(onehot, w_ref[...], preferred_element_type=jnp.float32)


def pack_params(W, b):
    """Build the packed kernel weight ONCE at parameter-load time (hoisted out of forward).

    w_packed[128*j + c, 16*j + e] = W[c, e] + b[e]   for c < 66; padded classes are zero.
    """
    w_pad = jnp.zeros((C_PAD, NUM_EMB), jnp.float32)
    w_pad = w_pad.at[:NUM_CLASSES].set(W.astype(jnp.float32) + b.astype(jnp.float32)[None, :])
    # Block-diagonal: 8 copies of the padded table on the diagonal -> (1024, 128).
    return jnp.kron(jnp.eye(GROUP, dtype=jnp.float32), w_pad)


def positional_encodings(offset, mask, w_packed, *, tile_m=TILE_M_DEFAULT):
    """offset, mask: int [...]; w_packed: from pack_params().  Returns [..., NUM_EMB] f32."""
    assert tile_m % GROUP == 0
    orig_shape = offset.shape
    N = offset.size
    n_steps = pl.cdiv(N, tile_m)
    N_pad = n_steps * tile_m

    off = offset.reshape(-1).astype(jnp.int32)
    msk = mask.reshape(-1).astype(jnp.int32)
    if N_pad != N:
        pad = N_pad - N
        off = jnp.pad(off, (0, pad))
        msk = jnp.pad(msk, (0, pad))                 # padded rows -> d = 65, sliced off below

    rows = N_pad // GROUP
    tile_r = tile_m // GROUP
    off = off.reshape(rows, GROUP)
    msk = msk.reshape(rows, GROUP)

    out = pl.pallas_call(
        pos_enc_kernel,
        grid=(n_steps,),
        in_specs=[
            pl.BlockSpec((tile_r, GROUP), lambda i: (i, 0)),
            pl.BlockSpec((tile_r, GROUP), lambda i: (i, 0)),
            pl.BlockSpec((GROUP * C_PAD, GROUP * NUM_EMB), lambda i: (0, 0)),
        ],
        out_specs=pl.BlockSpec((tile_r, GROUP * NUM_EMB), lambda i: (i, 0)),
        out_shape=jax.ShapeDtypeStruct((rows, GROUP * NUM_EMB), jnp.float32),
        compiler_params=pltpu.CompilerParams(dimension_semantics=("parallel",)),
    )(off, msk, w_packed)

    # (N_pad/8, 128) row-major is bit-identical to (N_pad, 16) row-major: reshape is free.
    # TODO(synk): if downstream consumes bf16, emit bf16 here (halves HBM store traffic).
    return out.reshape(N_pad, NUM_EMB)[:N].reshape(*orig_shape, NUM_EMB)


# ---------------- pure-JAX reference (for verification) ----------------
def ref_forward(offset, mask, W, b):
    d = jnp.clip(offset + MAX_REL, 0, 2 * MAX_REL) * mask + (1 - mask) * (2 * MAX_REL + 1)
    d_onehot = jax.nn.one_hot(d, NUM_CLASSES, dtype=jnp.float32)
    return d_onehot @ W + b


if __name__ == "__main__":
    # N = 2*37*48 = 3552: with tile_m=1024 this exercises a 4-step grid AND the row-padding
    # path (3552 -> 4096), addressing the single-step-only test gap from the review.
    B, L, K = 2, 37, 48

    key = jax.random.PRNGKey(0)
    k_off, k_msk, k_w, k_b = jax.random.split(key, 4)

    offset = jax.random.randint(k_off, (B, L, K), -40, 41, jnp.int32)   # exercises the clip
    mask = jax.random.randint(k_msk, (B, L, K), 0, 2, jnp.int32)        # 0/1 chain mask
    W = jax.random.normal(k_w, (NUM_CLASSES, NUM_EMB), jnp.float32) / jnp.sqrt(NUM_CLASSES)
    b = jax.random.normal(k_b, (NUM_EMB,), jnp.float32) * 0.01

    w_packed = pack_params(W, b)                     # built once, reused per forward call
    E_ref = ref_forward(offset, mask, W, b)

    # Multi-step grid + padding path.
    E_out = positional_encodings(offset, mask, w_packed, tile_m=1024)
    jax.block_until_ready(E_out)
    assert E_out.shape == (B, L, K, NUM_EMB)
    assert jnp.allclose(E_out, E_ref, atol=1e-5, rtol=1e-5)

    # Default (large) tile -> single-step grid path.
    E_out2 = positional_encodings(offset, mask, w_packed)
    jax.block_until_ready(E_out2)
    assert jnp.allclose(E_out2, E_ref, atol=1e-5, rtol=1e-5)

    print("KERNEL_OK")
</pallas_src>

<mosaic_0001>
module attributes {stable_mosaic.version = 11 : i64} {
  func.func @pos_enc_kernel(%arg0: i32, %arg1: memref<128x8xi32, #tpu.memory_space<vmem>>, %arg2: memref<128x8xi32, #tpu.memory_space<vmem>>, %arg3: memref<1024x128xf32, #tpu.memory_space<vmem>>, %arg4: memref<128x128xf32, #tpu.memory_space<vmem>>) attributes {dimension_semantics = [#tpu.dimension_semantics<parallel>], iteration_bounds = array<i64: 4>, scalar_prefetch = 0 : i64, scratch_operands = 0 : i64, tpu.core_type = #tpu.core_type<tc>, window_params = [{transform_indices = @transform_0, window_bounds = array<i64: 128, 8>}, {transform_indices = @transform_1, window_bounds = array<i64: 128, 8>}, {pipeline_mode = #tpu.pipeline_mode<synchronous>, transform_indices = @transform_2, window_bounds = array<i64: 1024, 128>}, {transform_indices = @transform_3, window_bounds = array<i64: 128, 128>}]} {
    %c0 = arith.constant 0 : index
    %c0_0 = arith.constant 0 : index
    %0 = vector.load %arg1[%c0, %c0_0] : memref<128x8xi32, #tpu.memory_space<vmem>>, vector<128x8xi32>
    %c0_1 = arith.constant 0 : index
    %c0_2 = arith.constant 0 : index
    %1 = vector.load %arg2[%c0_1, %c0_2] : memref<128x8xi32, #tpu.memory_space<vmem>>, vector<128x8xi32>
    %c32_i32 = arith.constant 32 : i32
    %2 = vector.broadcast %c32_i32 : i32 to vector<128x8xi32>
    %3 = arith.addi %0, %2 : vector<128x8xi32>
    %c0_i32 = arith.constant 0 : i32
    %c64_i32 = arith.constant 64 : i32
    %4 = vector.broadcast %c0_i32 : i32 to vector<128x8xi32>
    %5 = arith.maxsi %4, %3 : vector<128x8xi32>
    %6 = vector.broadcast %c64_i32 : i32 to vector<128x8xi32>
    %7 = arith.minsi %6, %5 : vector<128x8xi32>
    %8 = arith.muli %7, %1 : vector<128x8xi32>
    %c1_i32 = arith.constant 1 : i32
    %9 = vector.broadcast %c1_i32 : i32 to vector<128x8xi32>
    %10 = arith.subi %9, %1 : vector<128x8xi32>
    %c65_i32 = arith.constant 65 : i32
    %11 = vector.broadcast %c65_i32 : i32 to vector<128x8xi32>
    %12 = arith.muli %10, %11 : vector<128x8xi32>
    %13 = arith.addi %8, %12 : vector<128x8xi32>
    %14 = tpu.iota {dimensions = array<i32: 1>} : vector<128x128xi32>
    %15 = vector.extract_strided_slice %13 {offsets = [0, 0], sizes = [128, 1], strides = [1, 1]} : vector<128x8xi32> to vector<128x1xi32>
    %16 = vector.broadcast %15 : vector<128x1xi32> to vector<128x128xi32>
    %17 = arith.cmpi eq, %16, %14 : vector<128x128xi32>
    %18 = arith.extui %17 : vector<128x128xi1> to vector<128x128xi32>
    %19 = arith.sitofp %18 : vector<128x128xi32> to vector<128x128xf32>
    %20 = vector.extract_strided_slice %13 {offsets = [0, 1], sizes = [128, 1], strides = [1, 1]} : vector<128x8xi32> to vector<128x1xi32>
    %21 = vector.broadcast %20 : vector<128x1xi32> to vector<128x128xi32>
    %22 = arith.cmpi eq, %21, %14 : vector<128x128xi32>
    %23 = arith.extui %22 : vector<128x128xi1> to vector<128x128xi32>
    %24 = arith.sitofp %23 : vector<128x128xi32> to vector<128x128xf32>
    %25 = vector.extract_strided_slice %13 {offsets = [0, 2], sizes = [128, 1], strides = [1, 1]} : vector<128x8xi32> to vector<128x1xi32>
    %26 = vector.broadcast %25 : vector<128x1xi32> to vector<128x128xi32>
    %27 = arith.cmpi eq, %26, %14 : vector<128x128xi32>
    %28 = arith.extui %27 : vector<128x128xi1> to vector<128x128xi32>
    %29 = arith.sitofp %28 : vector<128x128xi32> to vector<128x128xf32>
    %30 = vector.extract_strided_slice %13 {offsets = [0, 3], sizes = [128, 1], strides = [1, 1]} : vector<128x8xi32> to vector<128x1xi32>
    %31 = vector.broadcast %30 : vector<128x1xi32> to vector<128x128xi32>
    %32 = arith.cmpi eq, %31, %14 : vector<128x128xi32>
    %33 = arith.extui %32 : vector<128x128xi1> to vector<128x128xi32>
    %34 = arith.sitofp %33 : vector<128x128xi32> to vector<128x128xf32>
    %35 = vector.extract_strided_slice %13 {offsets = [0, 4], sizes = [128, 1], strides = [1, 1]} : vector<128x8xi32> to vector<128x1xi32>
    %36 = vector.broadcast %35 : vector<128x1xi32> to vector<128x128xi32>
    %37 = arith.cmpi eq, %36, %14 : vector<128x128xi32>
    %38 = arith.extui %37 : vector<128x128xi1> to vector<128x128xi32>
    %39 = arith.sitofp %38 : vector<128x128xi32> to vector<128x128xf32>
    %40 = vector.extract_strided_slice %13 {offsets = [0, 5], sizes = [128, 1], strides = [1, 1]} : vector<128x8xi32> to vector<128x1xi32>
    %41 = vector.broadcast %40 : vector<128x1xi32> to vector<128x128xi32>
    %42 = arith.cmpi eq, %41, %14 : vector<128x128xi32>
    %43 = arith.extui %42 : vector<128x128xi1> to vector<128x128xi32>
    %44 = arith.sitofp %43 : vector<128x128xi32> to vector<128x128xf32>
    %45 = vector.extract_strided_slice %13 {offsets = [0, 6], sizes = [128, 1], strides = [1, 1]} : vector<128x8xi32> to vector<128x1xi32>
    %46 = vector.broadcast %45 : vector<128x1xi32> to vector<128x128xi32>
    %47 = arith.cmpi eq, %46, %14 : vector<128x128xi32>
    %48 = arith.extui %47 : vector<128x128xi1> to vector<128x128xi32>
    %49 = arith.sitofp %48 : vector<128x128xi32> to vector<128x128xf32>
    %50 = vector.extract_strided_slice %13 {offsets = [0, 7], sizes = [128, 1], strides = [1, 1]} : vector<128x8xi32> to vector<128x1xi32>
    %51 = vector.broadcast %50 : vector<128x1xi32> to vector<128x128xi32>
    %52 = arith.cmpi eq, %51, %14 : vector<128x128xi32>
    %53 = arith.extui %52 : vector<128x128xi1> to vector<128x128xi32>
    %54 = arith.sitofp %53 : vector<128x128xi32> to vector<128x128xf32>
    %55 = tpu.concatenate %19, %24, %29, %34, %39, %44, %49, %54 in 1 : vector<128x128xf32>, vector<128x128xf32>, vector<128x128xf32>, vector<128x128xf32>, vector<128x128xf32>, vector<128x128xf32>, vector<128x128xf32>, vector<128x128xf32> -> vector<128x1024xf32>
    %c0_3 = arith.constant 0 : index
    %c0_4 = arith.constant 0 : index
    %56 = vector.load %arg3[%c0_3, %c0_4] : memref<1024x128xf32, #tpu.memory_space<vmem>>, vector<1024x128xf32>
    %cst = arith.constant dense<0.000000e+00> : vector<128x128xf32>
    %57 = tpu.matmul %55, %56, %cst {dimension_numbers = #tpu.dot_dimension_numbers<[1], [0], [0], [1], [0, 0, 1, 1], [], []>} : vector<128x1024xf32>, vector<1024x128xf32>, vector<128x128xf32> -> vector<128x128xf32>
    %c0_5 = arith.constant 0 : index
    %c0_6 = arith.constant 0 : index
    %58 = vector.load %arg4[%c0_5, %c0_6] : memref<128x128xf32, #tpu.memory_space<vmem>>, vector<128x128xf32>
    tpu.vector_store %arg4[%c0_5, %c0_6], %57 {strides = array<i32>} : memref<128x128xf32, #tpu.memory_space<vmem>>, vector<128x128xf32>,
    return
  }
  func.func @transform_0(%arg0: i32) -> (i32, i32) {
    %c0_i32 = arith.constant 0 : i32
    %c0_i32_0 = arith.constant 0 : i32
    return %arg0, %c0_i32 : i32, i32
  }
  func.func @transform_1(%arg0: i32) -> (i32, i32) {
    %c0_i32 = arith.constant 0 : i32
    %c0_i32_0 = arith.constant 0 : i32
    return %arg0, %c0_i32 : i32, i32
  }
  func.func @transform_2(%arg0: i32) -> (i32, i32) {
    %c0_i32 = arith.constant 0 : i32
    %c0_i32_0 = arith.constant 0 : i32
    %c0_i32_1 = arith.constant 0 : i32
    return %c0_i32, %c0_i32_0 : i32, i32
  }
  func.func @transform_3(%arg0: i32) -> (i32, i32) {
    %c0_i32 = arith.constant 0 : i32
    %c0_i32_0 = arith.constant 0 : i32
    return %arg0, %c0_i32 : i32, i32
  }
}

</mosaic_0001>

<llo_original>
// kernel: tpu_custom_call.1
$region0: #{tpu_custom_call.1}
  #allocation0 [shape = 'u32[]', space=smem, size = 0x4, offset = 0x4, fixed_abs, tag = 'smem constant byte address 0x4 - core index']
  #allocation1 [shape = 'u32[144,128]{1,0:T(1,128)}', space=vmem, size = 0x12000, scoped, tag = 'internal scratch']
  %s0 = inlined_call_operand.vmem [shape: s32[512,8], index: 0, kind: input, shape index: {}]
  %s1 = inlined_call_operand.vmem [shape: s32[512,8], index: 1, kind: input, shape index: {}]
  %s2 = inlined_call_operand.vmem [shape: f32[1024,128], index: 2, kind: input, shape index: {}]
  %s3 = inlined_call_operand.hbm [shape: f32[512,128], index: 3, kind: output, shape index: {}]
  %s4 = sld [smem:[#allocation0]]
  $region45: #{tpu_custom_call.1} parent=0
    _
  %s6 = ssub.s32 1, %s4
  %s7 = scalar_select 0, %s6, %s4
  $region1: #{tpu_custom_call.1} parent=0
    #allocation2 [shape = 'u8[131072]{0}', space=vmem, size = 0x20000, scoped, tag = 'output window, operand 0']
    #allocation3 [shape = 's32[2]{0}', space=sflag, size = 0x8, scoped, tag = 'scoped memory for tpu_custom_call.1']
    %8 = vsyncpa [#allocation3], 0
    %s9 = scalar_lea.sflag [#allocation3], 1
    %10 = vsyncpa %s9, 0
    loop: start=0, step=1, limit=6
    $region2: #{tpu_custom_call.1} parent=1 // loop_pre_header
      _
    $region3: #{tpu_custom_call.1} parent=1 // loop_header
      %s12 = sphi 0, %s16
      %p13 = scmp.ge.s32.totalorder %s12, 6
      %s22 = sphi 0, %s24
      %s25 = sphi 0, %s22
      %s26 = sphi 0, %s25
      %s42 = sphi 0, %s26
      %s48 = sphi 0, %s50
      %s51 = sphi 0, %s48
      %s52 = sphi 0, %s51
      %s68 = sphi 0, %s52
      %s72 = sphi 0, %s72
      %s74 = sphi 0, %s72
      %s75 = sphi 0, %s74
      %s89 = sphi 0, %s75
      %s95 = sphi 0, %s97
      %s98 = sphi 0, %s95
      %s99 = sphi 0, %s98
      %s115 = sphi 0, %s99
    $region4: #{tpu_custom_call.1} parent=1 // loop_header_branch
      %15 = sbr.rel (%p13) target = $region8
    $region5: #{tpu_custom_call.1} parent=1 // loop_body
      %s17 = ssub.s32 %s12, 1
      %s18 = ssub.s32 %s12, 2
      %s19 = sadd.s32 %s12, 1
      %s20 = ssub.s32 %s12, %s19
      %p21 = scmp.eq.s32.totalorder %s20, 0
      %s23 = sadd.s32 %s22, 1
      %s24 = scalar_select %p21, %s22, %s23
      %p27 = pneg %p21
      %p28 = scmp.eq.s32.totalorder %s12, 3
      %p29 = por %p27, %p28
      %p30 = scmp.ne.s32.totalorder %s22, %s25
      %p31 = scmp.eq.s32.totalorder %s12, 0
      %p32 = por %p30, %p31
      %p33 = scmp.ne.s32.totalorder %s22, %s25
      %p34 = scmp.eq.s32.totalorder %s17, 3
      %p35 = por %p33, %p34
      %p36 = scmp.ne.s32.totalorder %s25, %s26
      %p37 = scmp.eq.s32.totalorder %s17, 0
      %p38 = por %p36, %p37
      %p39 = scmp.ne.s32.totalorder %s25, %s26
      %p40 = scmp.eq.s32.totalorder %s18, 3
      %p41 = por %p39, %p40
      %p43 = scmp.ne.s32.totalorder %s26, %s42
      %p44 = scmp.eq.s32.totalorder %s18, 0
      %p45 = por %p43, %p44
      %s46 = ssub.s32 %s12, %s19
      %p47 = scmp.eq.s32.totalorder %s46, 0
      %s49 = sadd.s32 %s48, 1
      %s50 = scalar_select %p47, %s48, %s49
      %p53 = pneg %p47
      %p54 = scmp.eq.s32.totalorder %s12, 3
      %p55 = por %p53, %p54
      %p56 = scmp.ne.s32.totalorder %s48, %s51
      %p57 = scmp.eq.s32.totalorder %s12, 0
      %p58 = por %p56, %p57
      %p59 = scmp.ne.s32.totalorder %s48, %s51
      %p60 = scmp.eq.s32.totalorder %s17, 3
      %p61 = por %p59, %p60
      %p62 = scmp.ne.s32.totalorder %s51, %s52
      %p63 = scmp.eq.s32.totalorder %s17, 0
      %p64 = por %p62, %p63
      %p65 = scmp.ne.s32.totalorder %s51, %s52
      %p66 = scmp.eq.s32.totalorder %s18, 3
      %p67 = por %p65, %p66
      %p69 = scmp.ne.s32.totalorder %s52, %s68
      %p70 = scmp.eq.s32.totalorder %s18, 0
      %p71 = por %p69, %p70
      %s73 = sadd.s32 %s72, 1
      %p76 = scmp.eq.s32.totalorder %s12, 3
      %p77 = scmp.ne.s32.totalorder %s72, %s74
      %p78 = scmp.eq.s32.totalorder %s12, 0
      %p79 = por %p77, %p78
      %p80 = scmp.ne.s32.totalorder %s72, %s74
      %p81 = scmp.eq.s32.totalorder %s17, 3
      %p82 = por %p80, %p81
      %p83 = scmp.ne.s32.totalorder %s74, %s75
      %p84 = scmp.eq.s32.totalorder %s17, 0
      %p85 = por %p83, %p84
      %p86 = scmp.ne.s32.totalorder %s74, %s75
      %p87 = scmp.eq.s32.totalorder %s18, 3
      %p88 = por %p86, %p87
      %p90 = scmp.ne.s32.totalorder %s75, %s89
      %p91 = scmp.eq.s32.totalorder %s18, 0
      %p92 = por %p90, %p91
      %s93 = ssub.s32 %s12, %s19
      %p94 = scmp.eq.s32.totalorder %s93, 0
      %s96 = sadd.s32 %s95, 1
      %s97 = scalar_select %p94, %s95, %s96
      %p100 = pneg %p94
      %p101 = scmp.eq.s32.totalorder %s12, 3
      %p102 = por %p100, %p101
      %p103 = scmp.ne.s32.totalorder %s95, %s98
      %p104 = scmp.eq.s32.totalorder %s12, 0
      %p105 = por %p103, %p104
      %p106 = scmp.ne.s32.totalorder %s95, %s98
      %p107 = scmp.eq.s32.totalorder %s17, 3
      %p108 = por %p106, %p107
      %p109 = scmp.ne.s32.totalorder %s98, %s99
      %p110 = scmp.eq.s32.totalorder %s17, 0
      %p111 = por %p109, %p110
      %p112 = scmp.ne.s32.totalorder %s98, %s99
      %p113 = scmp.eq.s32.totalorder %s18, 3
      %p114 = por %p112, %p113
      %p116 = scmp.ne.s32.totalorder %s99, %s115
      %p117 = scmp.eq.s32.totalorder %s18, 0
      %p118 = por %p116, %p117
      %p119 = scmp.le.s32.totalorder 1, %s12
      %p120 = scmp.lt.s32.totalorder %s12, 5
      %p121 = pnand %p119, %p120
      %p122 = pneg %p121
      // Predicated region
      $region9: #{tpu_custom_call.1} parent=5 // pred_check
        _
      $region10: #{tpu_custom_call.1} parent=5 // pred_check_branch
        %124 = sbr.rel (%p121) target = $region12
      $region11: #{tpu_custom_call.1} parent=5 // pred_region
        %s125 = ssub.s32 %s12, 1
        // Predicated region
        $region13: #{tpu_custom_call.1} parent=11 // pred_check
          %p126 = pneg %p85
        $region14: #{tpu_custom_call.1} parent=11 // pred_check_branch
          %128 = sbr.rel (%p126) target = $region16
        $region15: #{tpu_custom_call.1} parent=11 // pred_region
          _
        $region16: #{tpu_custom_call.1} parent=11 // pred_fallthru
          _
      $region12: #{tpu_custom_call.1} parent=5 // pred_fallthru
        _
      %p129 = scmp.lt.s32.totalorder %s12, 4
      // Predicated region
      $region17: #{tpu_custom_call.1} parent=5 // pred_check
        %p130 = pneg %p129
      $region18: #{tpu_custom_call.1} parent=5 // pred_check_branch
        %132 = sbr.rel (%p130) target = $region20
      $region19: #{tpu_custom_call.1} parent=5 // pred_region
        // Predicated region
        $region21: #{tpu_custom_call.1} parent=19 // pred_check
          %p133 = pneg %p32
        $region22: #{tpu_custom_call.1} parent=19 // pred_check_branch
          %135 = sbr.rel (%p133) target = $region24
        $region23: #{tpu_custom_call.1} parent=19 // pred_region
          %s136 = smul.u32 16, %s12
          %p137 = scmp.lt.s32.totalorder %s136, 63
          %s138 = scalar_select %p137, %s136, 63
          %s139 = smul.addr %s138, 8
          %s140 = scalar_lea.vmem %s0, %s139
          %s141 = smul.u32 16, %s12
        $region24: #{tpu_custom_call.1} parent=19 // pred_fallthru
          _
        // Predicated region
        $region25: #{tpu_custom_call.1} parent=19 // pred_check
          %p142 = pneg %p58
        $region26: #{tpu_custom_call.1} parent=19 // pred_check_branch
          %144 = sbr.rel (%p142) target = $region28
        $region27: #{tpu_custom_call.1} parent=19 // pred_region
          %s145 = smul.u32 16, %s12
          %p146 = scmp.lt.s32.totalorder %s145, 63
          %s147 = scalar_select %p146, %s145, 63
          %s148 = smul.addr %s147, 8
          %s149 = scalar_lea.vmem %s1, %s148
          %s150 = smul.u32 16, %s12
        $region28: #{tpu_custom_call.1} parent=19 // pred_fallthru
          _
      $region20: #{tpu_custom_call.1} parent=5 // pred_fallthru
        _
      %p151 = scmp.le.s32.totalorder 1, %s12
      %p152 = scmp.lt.s32.totalorder %s12, 5
      %p153 = pnand %p151, %p152
      %p154 = pneg %p153
      // Predicated region
      $region29: #{tpu_custom_call.1} parent=5 // pred_check
        _
      $region30: #{tpu_custom_call.1} parent=5 // pred_check_branch
        %156 = sbr.rel (%p153) target = $region32
      $region31: #{tpu_custom_call.1} parent=5 // pred_region
        %s157 = ssub.s32 %s12, 1
        %s158 = smul.u32 16, %s17
        %p159 = scmp.lt.s32.totalorder %s158, 63
        %s160 = scalar_select %p159, %s158, 63
        %s161 = smul.addr %s160, 8
        %s162 = scalar_lea.vmem %s0, %s161
        %p163 = pneg %p38
        %p164 = pneg %p35
        %s165 = smul.u32 16, %s17
        %p166 = scmp.lt.s32.totalorder %s165, 63
        %s167 = scalar_select %p166, %s165, 63
        %s168 = smul.addr %s167, 8
        %s169 = scalar_lea.vmem %s1, %s168
        %p170 = pneg %p64
        %p171 = pneg %p61
        %p172 = pneg %p85
        %p173 = pneg %p82
        %p174 = pneg %p111
        %p175 = pneg %p108
        %s176 = sand.u32 %s98, 1
        %s177 = scalar_lea.sflag [#allocation3], %s176
        %s178 = sand.u32 %s98, 1
        %s179 = smul.addr %s178, 128
        %s180 = scalar_lea.vmem [#allocation2], %s179
        %s181 = smul.u32 16, %s17
        %p182 = scmp.lt.s32.totalorder %s181, 63
        %s183 = scalar_select %p182, %s181, 63
        %s184 = smul.addr %s183, 8
        %s185 = scalar_lea.vmem %s0, %s184
        %s186 = smul.u32 16, %s17
        %s187 = smul.u32 16, %s17
        %p188 = scmp.lt.s32.totalorder %s187, 63
        %s189 = scalar_select %p188, %s187, 63
        %s190 = smul.addr %s189, 8
        %s191 = scalar_lea.vmem %s1, %s190
        %s192 = smul.u32 16, %s17
        %s193 = smul.u32 16, %s17
        %v194 = vld [vmem:[%s185] sm:$0xff]
        %v195 = vld [vmem:[%s185 + $0x8] sm:$0xff]
        %v196 = vld [vmem:[%s185 + $0x10] sm:$0xff]
        %v197 = vld [vmem:[%s185 + $0x18] sm:$0xff]
        %v198 = vld [vmem:[%s185 + $0x20] sm:$0xff]
        %v199 = vld [vmem:[%s185 + $0x28] sm:$0xff]
        %v200 = vld [vmem:[%s185 + $0x30] sm:$0xff]
        %v201 = vld [vmem:[%s185 + $0x38] sm:$0xff]
        %v202 = vld [vmem:[%s185 + $0x40] sm:$0xff]
        %v203 = vld [vmem:[%s185 + $0x48] sm:$0xff]
        %v204 = vld [vmem:[%s185 + $0x50] sm:$0xff]
        %v205 = vld [vmem:[%s185 + $0x58] sm:$0xff]
        %v206 = vld [vmem:[%s185 + $0x60] sm:$0xff]
        %v207 = vld [vmem:[%s185 + $0x68] sm:$0xff]
        %v208 = vld [vmem:[%s185 + $0x70] sm:$0xff]
        %v209 = vld [vmem:[%s185 + $0x78] sm:$0xff]
        %v210 = vld [vmem:[%s191] sm:$0xff]
        %v211 = vld [vmem:[%s191 + $0x8] sm:$0xff]
        %v212 = vld [vmem:[%s191 + $0x10] sm:$0xff]
        %v213 = vld [vmem:[%s191 + $0x18] sm:$0xff]
        %v214 = vld [vmem:[%s191 + $0x20] sm:$0xff]
        %v215 = vld [vmem:[%s191 + $0x28] sm:$0xff]
        %v216 = vld [vmem:[%s191 + $0x30] sm:$0xff]
        %v217 = vld [vmem:[%s191 + $0x38] sm:$0xff]
        %v218 = vld [vmem:[%s191 + $0x40] sm:$0xff]
        %v219 = vld [vmem:[%s191 + $0x48] sm:$0xff]
        %v220 = vld [vmem:[%s191 + $0x50] sm:$0xff]
        %v221 = vld [vmem:[%s191 + $0x58] sm:$0xff]
        %v222 = vld [vmem:[%s191 + $0x60] sm:$0xff]
        %v223 = vld [vmem:[%s191 + $0x68] sm:$0xff]
        %v224 = vld [vmem:[%s191 + $0x70] sm:$0xff]
        %v225 = vld [vmem:[%s191 + $0x78] sm:$0xff]
        %v226 = vadd.s32 %v194, 32
        %v227 = vadd.s32 %v195, 32
        %v228 = vadd.s32 %v196, 32
        %v229 = vadd.s32 %v197, 32
        %v230 = vadd.s32 %v198, 32
        %v231 = vadd.s32 %v199, 32
        %v232 = vadd.s32 %v200, 32
        %v233 = vadd.s32 %v201, 32
        %v234 = vadd.s32 %v202, 32
        %v235 = vadd.s32 %v203, 32
        %v236 = vadd.s32 %v204, 32
        %v237 = vadd.s32 %v205, 32
        %v238 = vadd.s32 %v206, 32
        %v239 = vadd.s32 %v207, 32
        %v240 = vadd.s32 %v208, 32
        %v241 = vadd.s32 %v209, 32
        %vm242 = vcmp.gt.s32.totalorder %v226, 0
        %v243 = vsel %vm242, %v226, 0
        %vm244 = vcmp.gt.s32.totalorder %v227, 0
        %v245 = vsel %vm244, %v227, 0
        %vm246 = vcmp.gt.s32.totalorder %v228, 0
        %v247 = vsel %vm246, %v228, 0
        %vm248 = vcmp.gt.s32.totalorder %v229, 0
        %v249 = vsel %vm248, %v229, 0
        %vm250 = vcmp.gt.s32.totalorder %v230, 0
        %v251 = vsel %vm250, %v230, 0
        %vm252 = vcmp.gt.s32.totalorder %v231, 0
        %v253 = vsel %vm252, %v231, 0
        %vm254 = vcmp.gt.s32.totalorder %v232, 0
        %v255 = vsel %vm254, %v232, 0
        %vm256 = vcmp.gt.s32.totalorder %v233, 0
        %v257 = vsel %vm256, %v233, 0
        %vm258 = vcmp.gt.s32.totalorder %v234, 0
        %v259 = vsel %vm258, %v234, 0
        %vm260 = vcmp.gt.s32.totalorder %v235, 0
        %v261 = vsel %vm260, %v235, 0
        %vm262 = vcmp.gt.s32.totalorder %v236, 0
        %v263 = vsel %vm262, %v236, 0
        %vm264 = vcmp.gt.s32.totalorder %v237, 0
        %v265 = vsel %vm264, %v237, 0
        %vm266 = vcmp.gt.s32.totalorder %v238, 0
        %v267 = vsel %vm266, %v238, 0
        %vm268 = vcmp.gt.s32.totalorder %v239, 0
        %v269 = vsel %vm268, %v239, 0
        %vm270 = vcmp.gt.s32.totalorder %v240, 0
        %v271 = vsel %vm270, %v240, 0
        %vm272 = vcmp.gt.s32.totalorder %v241, 0
        %v273 = vsel %vm272, %v241, 0
        %vm274 = vcmp.lt.s32.totalorder %v243, 64
        %v275 = vsel %vm274, %v243, 64
        %vm276 = vcmp.lt.s32.totalorder %v245, 64
        %v277 = vsel %vm276, %v245, 64
        %vm278 = vcmp.lt.s32.totalorder %v247, 64
        %v279 = vsel %vm278, %v247, 64
        %vm280 = vcmp.lt.s32.totalorder %v249, 64
        %v281 = vsel %vm280, %v249, 64
        %vm282 = vcmp.lt.s32.totalorder %v251, 64
        %v283 = vsel %vm282, %v251, 64
        %vm284 = vcmp.lt.s32.totalorder %v253, 64
        %v285 = vsel %vm284, %v253, 64
        %vm286 = vcmp.lt.s32.totalorder %v255, 64
        %v287 = vsel %vm286, %v255, 64
        %vm288 = vcmp.lt.s32.totalorder %v257, 64
        %v289 = vsel %vm288, %v257, 64
        %vm290 = vcmp.lt.s32.totalorder %v259, 64
        %v291 = vsel %vm290, %v259, 64
        %vm292 = vcmp.lt.s32.totalorder %v261, 64
        %v293 = vsel %vm292, %v261, 64
        %vm294 = vcmp.lt.s32.totalorder %v263, 64
        %v295 = vsel %vm294, %v263, 64
        %vm296 = vcmp.lt.s32.totalorder %v265, 64
        %v297 = vsel %vm296, %v265, 64
        %vm298 = vcmp.lt.s32.totalorder %v267, 64
        %v299 = vsel %vm298, %v267, 64
        %vm300 = vcmp.lt.s32.totalorder %v269, 64
        %v301 = vsel %vm300, %v269, 64
        %vm302 = vcmp.lt.s32.totalorder %v271, 64
        %v303 = vsel %vm302, %v271, 64
        %vm304 = vcmp.lt.s32.totalorder %v273, 64
        %v305 = vsel %vm304, %v273, 64
        %v306 = vmul.u32 %v275, %v210
        %v307 = vmul.u32 %v277, %v211
        %v308 = vmul.u32 %v279, %v212
        %v309 = vmul.u32 %v281, %v213
        %v310 = vmul.u32 %v283, %v214
        %v311 = vmul.u32 %v285, %v215
        %v312 = vmul.u32 %v287, %v216
        %v313 = vmul.u32 %v289, %v217
        %v314 = vmul.u32 %v291, %v218
        %v315 = vmul.u32 %v293, %v219
        %v316 = vmul.u32 %v295, %v220
        %v317 = vmul.u32 %v297, %v221
        %v318 = vmul.u32 %v299, %v222
        %v319 = vmul.u32 %v301, %v223
        %v320 = vmul.u32 %v303, %v224
        %v321 = vmul.u32 %v305, %v225
        %v322 = vsub.s32 1, %v210
        %v323 = vsub.s32 1, %v211
        %v324 = vsub.s32 1, %v212
        %v325 = vsub.s32 1, %v213
        %v326 = vsub.s32 1, %v214
        %v327 = vsub.s32 1, %v215
        %v328 = vsub.s32 1, %v216
        %v329 = vsub.s32 1, %v217
        %v330 = vsub.s32 1, %v218
        %v331 = vsub.s32 1, %v219
        %v332 = vsub.s32 1, %v220
        %v333 = vsub.s32 1, %v221
        %v334 = vsub.s32 1, %v222
        %v335 = vsub.s32 1, %v223
        %v336 = vsub.s32 1, %v224
        %v337 = vsub.s32 1, %v225
        %v338 = vmul.u32 %v322, 65
        %v339 = vmul.u32 %v323, 65
        %v340 = vmul.u32 %v324, 65
        %v341 = vmul.u32 %v325, 65
        %v342 = vmul.u32 %v326, 65
        %v343 = vmul.u32 %v327, 65
        %v344 = vmul.u32 %v328, 65
        %v345 = vmul.u32 %v329, 65
        %v346 = vmul.u32 %v330, 65
        %v347 = vmul.u32 %v331, 65
        %v348 = vmul.u32 %v332, 65
        %v349 = vmul.u32 %v333, 65
        %v350 = vmul.u32 %v334, 65
        %v351 = vmul.u32 %v335, 65
        %v352 = vmul.u32 %v336, 65
        %v353 = vmul.u32 %v337, 65
        %v354 = vadd.s32 %v306, %v338
        %v355 = vadd.s32 %v307, %v339
        %v356 = vadd.s32 %v308, %v340
        %v357 = vadd.s32 %v309, %v341
        %v358 = vadd.s32 %v310, %v342
        %v359 = vadd.s32 %v311, %v343
        %v360 = vadd.s32 %v312, %v344
        %v361 = vadd.s32 %v313, %v345
        %v362 = vadd.s32 %v314, %v346
        %v363 = vadd.s32 %v315, %v347
        %v364 = vadd.s32 %v316, %v348
        %v365 = vadd.s32 %v317, %v349
        %v366 = vadd.s32 %v318, %v350
        %v367 = vadd.s32 %v319, %v351
        %v368 = vadd.s32 %v320, %v352
        %v369 = vadd.s32 %v321, %v353
        %v370 = vlaneseq
        %v371 = vand.u32 %v370, 127
        %372 = vset.pattern.permute.xlu0 0
        %373 = vperm.xlu0 %372, %v354
        %v374 = vpop.permute.xlu0 %373
        %375 = vset.pattern.permute.xlu0 0
        %376 = vperm.xlu0 %375, %v355
        %v377 = vpop.permute.xlu0 %376
        %378 = vset.pattern.permute.xlu0 0
        %379 = vperm.xlu0 %378, %v356
        %v380 = vpop.permute.xlu0 %379
        %381 = vset.pattern.permute.xlu0 0
        %382 = vperm.xlu0 %381, %v357
        %v383 = vpop.permute.xlu0 %382
        %384 = vset.pattern.permute.xlu0 0
        %385 = vperm.xlu0 %384, %v358
        %v386 = vpop.permute.xlu0 %385
        %387 = vset.pattern.permute.xlu0 0
        %388 = vperm.xlu0 %387, %v359
        %v389 = vpop.permute.xlu0 %388
        %390 = vset.pattern.permute.xlu0 0
        %391 = vperm.xlu0 %390, %v360
        %v392 = vpop.permute.xlu0 %391
        %393 = vset.pattern.permute.xlu0 0
        %394 = vperm.xlu0 %393, %v361
        %v395 = vpop.permute.xlu0 %394
        %396 = vset.pattern.permute.xlu0 0
        %397 = vperm.xlu0 %396, %v362
        %v398 = vpop.permute.xlu0 %397
        %399 = vset.pattern.permute.xlu0 0
        %400 = vperm.xlu0 %399, %v363
        %v401 = vpop.permute.xlu0 %400
        %402 = vset.pattern.permute.xlu0 0
        %403 = vperm.xlu0 %402, %v364
        %v404 = vpop.permute.xlu0 %403
        %405 = vset.pattern.permute.xlu0 0
        %406 = vperm.xlu0 %405, %v365
        %v407 = vpop.permute.xlu0 %406
        %408 = vset.pattern.permute.xlu0 0
        %409 = vperm.xlu0 %408, %v366
        %v410 = vpop.permute.xlu0 %409
        %411 = vset.pattern.permute.xlu0 0
        %412 = vperm.xlu0 %411, %v367
        %v413 = vpop.permute.xlu0 %412
        %414 = vset.pattern.permute.xlu0 0
        %415 = vperm.xlu0 %414, %v368
        %v416 = vpop.permute.xlu0 %415
        %417 = vset.pattern.permute.xlu0 0
        %418 = vperm.xlu0 %417, %v369
        %v419 = vpop.permute.xlu0 %418
        %vm420 = vcmp.eq.s32.totalorder %v374, %v371
        %vm421 = vcmp.eq.s32.totalorder %v377, %v371
        %vm422 = vcmp.eq.s32.totalorder %v380, %v371
        %vm423 = vcmp.eq.s32.totalorder %v383, %v371
        %vm424 = vcmp.eq.s32.totalorder %v386, %v371
        %vm425 = vcmp.eq.s32.totalorder %v389, %v371
        %vm426 = vcmp.eq.s32.totalorder %v392, %v371
        %vm427 = vcmp.eq.s32.totalorder %v395, %v371
        %vm428 = vcmp.eq.s32.totalorder %v398, %v371
        %vm429 = vcmp.eq.s32.totalorder %v401, %v371
        %vm430 = vcmp.eq.s32.totalorder %v404, %v371
        %vm431 = vcmp.eq.s32.totalorder %v407, %v371
        %vm432 = vcmp.eq.s32.totalorder %v410, %v371
        %vm433 = vcmp.eq.s32.totalorder %v413, %v371
        %vm434 = vcmp.eq.s32.totalorder %v416, %v371
        %vm435 = vcmp.eq.s32.totalorder %v419, %v371
        %v436 = vsel %vm420, 1, 0
        %v437 = vsel %vm421, 1, 0
        %v438 = vsel %vm422, 1, 0
        %v439 = vsel %vm423, 1, 0
        %v440 = vsel %vm424, 1, 0
        %v441 = vsel %vm425, 1, 0
        %v442 = vsel %vm426, 1, 0
        %v443 = vsel %vm427, 1, 0
        %v444 = vsel %vm428, 1, 0
        %v445 = vsel %vm429, 1, 0
        %v446 = vsel %vm430, 1, 0
        %v447 = vsel %vm431, 1, 0
        %v448 = vsel %vm432, 1, 0
        %v449 = vsel %vm433, 1, 0
        %v450 = vsel %vm434, 1, 0
        %v451 = vsel %vm435, 1, 0
        %v452 = vcvt.s32.f32 %v436
        %v453 = vcvt.s32.f32 %v437
        %v454 = vcvt.s32.f32 %v438
        %v455 = vcvt.s32.f32 %v439
        %v456 = vcvt.s32.f32 %v440
        %v457 = vcvt.s32.f32 %v441
        %v458 = vcvt.s32.f32 %v442
        %v459 = vcvt.s32.f32 %v443
        %v460 = vcvt.s32.f32 %v444
        %v461 = vcvt.s32.f32 %v445
        %v462 = vcvt.s32.f32 %v446
        %v463 = vcvt.s32.f32 %v447
        %v464 = vcvt.s32.f32 %v448
        %v465 = vcvt.s32.f32 %v449
        %v466 = vcvt.s32.f32 %v450
        %v467 = vcvt.s32.f32 %v451
        %468 = vset.pattern.permute.xlu0 1
        %469 = vperm.xlu0 %468, %v354
        %v470 = vpop.permute.xlu0 %469
        %471 = vset.pattern.permute.xlu0 1
        %472 = vperm.xlu0 %471, %v355
        %v473 = vpop.permute.xlu0 %472
        %474 = vset.pattern.permute.xlu0 1
        %475 = vperm.xlu0 %474, %v356
        %v476 = vpop.permute.xlu0 %475
        %477 = vset.pattern.permute.xlu0 1
        %478 = vperm.xlu0 %477, %v357
        %v479 = vpop.permute.xlu0 %478
        %480 = vset.pattern.permute.xlu0 1
        %481 = vperm.xlu0 %480, %v358
        %v482 = vpop.permute.xlu0 %481
        %483 = vset.pattern.permute.xlu0 1
        %484 = vperm.xlu0 %483, %v359
        %v485 = vpop.permute.xlu0 %484
        %486 = vset.pattern.permute.xlu0 1
        %487 = vperm.xlu0 %486, %v360
        %v488 = vpop.permute.xlu0 %487
        %489 = vset.pattern.permute.xlu0 1
        %490 = vperm.xlu0 %489, %v361
        %v491 = vpop.permute.xlu0 %490
        %492 = vset.pattern.permute.xlu0 1
        %493 = vperm.xlu0 %492, %v362
        %v494 = vpop.permute.xlu0 %493
        %495 = vset.pattern.permute.xlu0 1
        %496 = vperm.xlu0 %495, %v363
        %v497 = vpop.permute.xlu0 %496
        %498 = vset.pattern.permute.xlu0 1
        %499 = vperm.xlu0 %498, %v364
        %v500 = vpop.permute.xlu0 %499
        %501 = vset.pattern.permute.xlu0 1
        %502 = vperm.xlu0 %501, %v365
        %v503 = vpop.permute.xlu0 %502
        %504 = vset.pattern.permute.xlu0 1
        %505 = vperm.xlu0 %504, %v366
        %v506 = vpop.permute.xlu0 %505
        %507 = vset.pattern.permute.xlu0 1
        %508 = vperm.xlu0 %507, %v367
        %v509 = vpop.permute.xlu0 %508
        %510 = vset.pattern.permute.xlu0 1
        %511 = vperm.xlu0 %510, %v368
        %v512 = vpop.permute.xlu0 %511
        %513 = vset.pattern.permute.xlu0 1
        %514 = vperm.xlu0 %513, %v369
        %v515 = vpop.permute.xlu0 %514
        %vm516 = vcmp.eq.s32.totalorder %v470, %v371
        %vm517 = vcmp.eq.s32.totalorder %v473, %v371
        %vm518 = vcmp.eq.s32.totalorder %v476, %v371
        %vm519 = vcmp.eq.s32.totalorder %v479, %v371
        %vm520 = vcmp.eq.s32.totalorder %v482, %v371
        %vm521 = vcmp.eq.s32.totalorder %v485, %v371
        %vm522 = vcmp.eq.s32.totalorder %v488, %v371
        %vm523 = vcmp.eq.s32.totalorder %v491, %v371
        %vm524 = vcmp.eq.s32.totalorder %v494, %v371
        %vm525 = vcmp.eq.s32.totalorder %v497, %v371
        %vm526 = vcmp.eq.s32.totalorder %v500, %v371
        %vm527 = vcmp.eq.s32.totalorder %v503, %v371
        %vm528 = vcmp.eq.s32.totalorder %v506, %v371
        %vm529 = vcmp.eq.s32.totalorder %v509, %v371
        %vm530 = vcmp.eq.s32.totalorder %v512, %v371
        %vm531 = vcmp.eq.s32.totalorder %v515, %v371
        %v532 = vsel %vm516, 1, 0
        %v533 = vsel %vm517, 1, 0
        %v534 = vsel %vm518, 1, 0
        %v535 = vsel %vm519, 1, 0
        %v536 = vsel %vm520, 1, 0
        %v537 = vsel %vm521, 1, 0
        %v538 = vsel %vm522, 1, 0
        %v539 = vsel %vm523, 1, 0
        %v540 = vsel %vm524, 1, 0
        %v541 = vsel %vm525, 1, 0
        %v542 = vsel %vm526, 1, 0
        %v543 = vsel %vm527, 1, 0
        %v544 = vsel %vm528, 1, 0
        %v545 = vsel %vm529, 1, 0
        %v546 = vsel %vm530, 1, 0
        %v547 = vsel %vm531, 1, 0
        %v548 = vcvt.s32.f32 %v532
        %v549 = vcvt.s32.f32 %v533
        %v550 = vcvt.s32.f32 %v534
        %v551 = vcvt.s32.f32 %v535
        %v552 = vcvt.s32.f32 %v536
        %v553 = vcvt.s32.f32 %v537
        %v554 = vcvt.s32.f32 %v538
        %v555 = vcvt.s32.f32 %v539
        %v556 = vcvt.s32.f32 %v540
        %v557 = vcvt.s32.f32 %v541
        %v558 = vcvt.s32.f32 %v542
        %v559 = vcvt.s32.f32 %v543
        %v560 = vcvt.s32.f32 %v544
        %v561 = vcvt.s32.f32 %v545
        %v562 = vcvt.s32.f32 %v546
        %v563 = vcvt.s32.f32 %v547
        %564 = vset.pattern.permute.xlu0 2
        %565 = vperm.xlu0 %564, %v354
        %v566 = vpop.permute.xlu0 %565
        %567 = vset.pattern.permute.xlu0 2
        %568 = vperm.xlu0 %567, %v355
        %v569 = vpop.permute.xlu0 %568
        %570 = vset.pattern.permute.xlu0 2
        %571 = vperm.xlu0 %570, %v356
        %v572 = vpop.permute.xlu0 %571
        %573 = vset.pattern.permute.xlu0 2
        %574 = vperm.xlu0 %573, %v357
        %v575 = vpop.permute.xlu0 %574
        %576 = vset.pattern.permute.xlu0 2
        %577 = vperm.xlu0 %576, %v358
        %v578 = vpop.permute.xlu0 %577
        %579 = vset.pattern.permute.xlu0 2
        %580 = vperm.xlu0 %579, %v359
        %v581 = vpop.permute.xlu0 %580
        %582 = vset.pattern.permute.xlu0 2
        %583 = vperm.xlu0 %582, %v360
        %v584 = vpop.permute.xlu0 %583
        %585 = vset.pattern.permute.xlu0 2
        %586 = vperm.xlu0 %585, %v361
        %v587 = vpop.permute.xlu0 %586
        %588 = vset.pattern.permute.xlu0 2
        %589 = vperm.xlu0 %588, %v362
        %v590 = vpop.permute.xlu0 %589
        %591 = vset.pattern.permute.xlu0 2
        %592 = vperm.xlu0 %591, %v363
        %v593 = vpop.permute.xlu0 %592
        %594 = vset.pattern.permute.xlu0 2
        %595 = vperm.xlu0 %594, %v364
        %v596 = vpop.permute.xlu0 %595
        %597 = vset.pattern.permute.xlu0 2
        %598 = vperm.xlu0 %597, %v365
        %v599 = vpop.permute.xlu0 %598
        %600 = vset.pattern.permute.xlu0 2
        %601 = vperm.xlu0 %600, %v366
        %v602 = vpop.permute.xlu0 %601
        %603 = vset.pattern.permute.xlu0 2
        %604 = vperm.xlu0 %603, %v367
        %v605 = vpop.permute.xlu0 %604
        %606 = vset.pattern.permute.xlu0 2
        %607 = vperm.xlu0 %606, %v368
        %v608 = vpop.permute.xlu0 %607
        %609 = vset.pattern.permute.xlu0 2
        %610 = vperm.xlu0 %609, %v369
        %v611 = vpop.permute.xlu0 %610
        %vm612 = vcmp.eq.s32.totalorder %v566, %v371
        %vm613 = vcmp.eq.s32.totalorder %v569, %v371
        %vm614 = vcmp.eq.s32.totalorder %v572, %v371
        %vm615 = vcmp.eq.s32.totalorder %v575, %v371
        %vm616 = vcmp.eq.s32.totalorder %v578, %v371
        %vm617 = vcmp.eq.s32.totalorder %v581, %v371
        %vm618 = vcmp.eq.s32.totalorder %v584, %v371
        %vm619 = vcmp.eq.s32.totalorder %v587, %v371
        %vm620 = vcmp.eq.s32.totalorder %v590, %v371
        %vm621 = vcmp.eq.s32.totalorder %v593, %v371
        %vm622 = vcmp.eq.s32.totalorder %v596, %v371
        %vm623 = vcmp.eq.s32.totalorder %v599, %v371
        %vm624 = vcmp.eq.s32.totalorder %v602, %v371
        %vm625 = vcmp.eq.s32.totalorder %v605, %v371
        %vm626 = vcmp.eq.s32.totalorder %v608, %v371
        %vm627 = vcmp.eq.s32.totalorder %v611, %v371
        %v628 = vsel %vm612, 1, 0
        %v629 = vsel %vm613, 1, 0
        %v630 = vsel %vm614, 1, 0
        %v631 = vsel %vm615, 1, 0
        %v632 = vsel %vm616, 1, 0
        %v633 = vsel %vm617, 1, 0
        %v634 = vsel %vm618, 1, 0
        %v635 = vsel %vm619, 1, 0
        %v636 = vsel %vm620, 1, 0
        %v637 = vsel %vm621, 1, 0
        %v638 = vsel %vm622, 1, 0
        %v639 = vsel %vm623, 1, 0
        %v640 = vsel %vm624, 1, 0
        %v641 = vsel %vm625, 1, 0
        %v642 = vsel %vm626, 1, 0
        %v643 = vsel %vm627, 1, 0
        %v644 = vcvt.s32.f32 %v628
        %v645 = vcvt.s32.f32 %v629
        %v646 = vcvt.s32.f32 %v630
        %v647 = vcvt.s32.f32 %v631
        %v648 = vcvt.s32.f32 %v632
        %v649 = vcvt.s32.f32 %v633
        %v650 = vcvt.s32.f32 %v634
        %v651 = vcvt.s32.f32 %v635
        %v652 = vcvt.s32.f32 %v636
        %v653 = vcvt.s32.f32 %v637
        %v654 = vcvt.s32.f32 %v638
        %v655 = vcvt.s32.f32 %v639
        %v656 = vcvt.s32.f32 %v640
        %v657 = vcvt.s32.f32 %v641
        %v658 = vcvt.s32.f32 %v642
        %v659 = vcvt.s32.f32 %v643
        %660 = vset.pattern.permute.xlu0 3
        %661 = vperm.xlu0 %660, %v354
        %v662 = vpop.permute.xlu0 %661
        %663 = vset.pattern.permute.xlu0 3
        %664 = vperm.xlu0 %663, %v355
        %v665 = vpop.permute.xlu0 %664
        %666 = vset.pattern.permute.xlu0 3
        %667 = vperm.xlu0 %666, %v356
        %v668 = vpop.permute.xlu0 %667
        %669 = vset.pattern.permute.xlu0 3
        %670 = vperm.xlu0 %669, %v357
        %v671 = vpop.permute.xlu0 %670
        %672 = vset.pattern.permute.xlu0 3
        %673 = vperm.xlu0 %672, %v358
        %v674 = vpop.permute.xlu0 %673
        %675 = vset.pattern.permute.xlu0 3
        %676 = vperm.xlu0 %675, %v359
        %v677 = vpop.permute.xlu0 %676
        %678 = vset.pattern.permute.xlu0 3
        %679 = vperm.xlu0 %678, %v360
        %v680 = vpop.permute.xlu0 %679
        %681 = vset.pattern.permute.xlu0 3
        %682 = vperm.xlu0 %681, %v361
        %v683 = vpop.permute.xlu0 %682
        %684 = vset.pattern.permute.xlu0 3
        %685 = vperm.xlu0 %684, %v362
        %v686 = vpop.permute.xlu0 %685
        %687 = vset.pattern.permute.xlu0 3
        %688 = vperm.xlu0 %687, %v363
        %v689 = vpop.permute.xlu0 %688
        %690 = vset.pattern.permute.xlu0 3
        %691 = vperm.xlu0 %690, %v364
        %v692 = vpop.permute.xlu0 %691
        %693 = vset.pattern.permute.xlu0 3
        %694 = vperm.xlu0 %693, %v365
        %v695 = vpop.permute.xlu0 %694
        %696 = vset.pattern.permute.xlu0 3
        %697 = vperm.xlu0 %696, %v366
        %v698 = vpop.permute.xlu0 %697
        %699 = vset.pattern.permute.xlu0 3
        %700 = vperm.xlu0 %699, %v367
        %v701 = vpop.permute.xlu0 %700
        %702 = vset.pattern.permute.xlu0 3
        %703 = vperm.xlu0 %702, %v368
        %v704 = vpop.permute.xlu0 %703
        %705 = vset.pattern.permute.xlu0 3
        %706 = vperm.xlu0 %705, %v369
        %v707 = vpop.permute.xlu0 %706
        %vm708 = vcmp.eq.s32.totalorder %v662, %v371
        %vm709 = vcmp.eq.s32.totalorder %v665, %v371
        %vm710 = vcmp.eq.s32.totalorder %v668, %v371
        %vm711 = vcmp.eq.s32.totalorder %v671, %v371
        %vm712 = vcmp.eq.s32.totalorder %v674, %v371
        %vm713 = vcmp.eq.s32.totalorder %v677, %v371
        %vm714 = vcmp.eq.s32.totalorder %v680, %v371
        %vm715 = vcmp.eq.s32.totalorder %v683, %v371
        %vm716 = vcmp.eq.s32.totalorder %v686, %v371
        %vm717 = vcmp.eq.s32.totalorder %v689, %v371
        %vm718 = vcmp.eq.s32.totalorder %v692, %v371
        %vm719 = vcmp.eq.s32.totalorder %v695, %v371
        %vm720 = vcmp.eq.s32.totalorder %v698, %v371
        %vm721 = vcmp.eq.s32.totalorder %v701, %v371
        %vm722 = vcmp.eq.s32.totalorder %v704, %v371
        %vm723 = vcmp.eq.s32.totalorder %v707, %v371
        %v724 = vsel %vm708, 1, 0
        %v725 = vsel %vm709, 1, 0
        %v726 = vsel %vm710, 1, 0
        %v727 = vsel %vm711, 1, 0
        %v728 = vsel %vm712, 1, 0
        %v729 = vsel %vm713, 1, 0
        %v730 = vsel %vm714, 1, 0
        %v731 = vsel %vm715, 1, 0
        %v732 = vsel %vm716, 1, 0
        %v733 = vsel %vm717, 1, 0
        %v734 = vsel %vm718, 1, 0
        %v735 = vsel %vm719, 1, 0
        %v736 = vsel %vm720, 1, 0
        %v737 = vsel %vm721, 1, 0
        %v738 = vsel %vm722, 1, 0
        %v739 = vsel %vm723, 1, 0
        %v740 = vcvt.s32.f32 %v724
        %v741 = vcvt.s32.f32 %v725
        %v742 = vcvt.s32.f32 %v726
        %v743 = vcvt.s32.f32 %v727
        %v744 = vcvt.s32.f32 %v728
        %v745 = vcvt.s32.f32 %v729
        %v746 = vcvt.s32.f32 %v730
        %v747 = vcvt.s32.f32 %v731
        %v748 = vcvt.s32.f32 %v732
        %v749 = vcvt.s32.f32 %v733
        %v750 = vcvt.s32.f32 %v734
        %v751 = vcvt.s32.f32 %v735
        %v752 = vcvt.s32.f32 %v736
        %v753 = vcvt.s32.f32 %v737
        %v754 = vcvt.s32.f32 %v738
        %v755 = vcvt.s32.f32 %v739
        %756 = vset.pattern.permute.xlu0 4
        %757 = vperm.xlu0 %756, %v354
        %v758 = vpop.permute.xlu0 %757
        %759 = vset.pattern.permute.xlu0 4
        %760 = vperm.xlu0 %759, %v355
        %v761 = vpop.permute.xlu0 %760
        %762 = vset.pattern.permute.xlu0 4
        %763 = vperm.xlu0 %762, %v356
        %v764 = vpop.permute.xlu0 %763
        %765 = vset.pattern.permute.xlu0 4
        %766 = vperm.xlu0 %765, %v357
        %v767 = vpop.permute.xlu0 %766
        %768 = vset.pattern.permute.xlu0 4
        %769 = vperm.xlu0 %768, %v358
        %v770 = vpop.permute.xlu0 %769
        %771 = vset.pattern.permute.xlu0 4
        %772 = vperm.xlu0 %771, %v359
        %v773 = vpop.permute.xlu0 %772
        %774 = vset.pattern.permute.xlu0 4
        %775 = vperm.xlu0 %774, %v360
        %v776 = vpop.permute.xlu0 %775
        %777 = vset.pattern.permute.xlu0 4
        %778 = vperm.xlu0 %777, %v361
        %v779 = vpop.permute.xlu0 %778
        %780 = vset.pattern.permute.xlu0 4
        %781 = vperm.xlu0 %780, %v362
        %v782 = vpop.permute.xlu0 %781
        %783 = vset.pattern.permute.xlu0 4
        %784 = vperm.xlu0 %783, %v363
        %v785 = vpop.permute.xlu0 %784
        %786 = vset.pattern.permute.xlu0 4
        %787 = vperm.xlu0 %786, %v364
        %v788 = vpop.permute.xlu0 %787
        %789 = vset.pattern.permute.xlu0 4
        %790 = vperm.xlu0 %789, %v365
        %v791 = vpop.permute.xlu0 %790
        %792 = vset.pattern.permute.xlu0 4
        %793 = vperm.xlu0 %792, %v366
        %v794 = vpop.permute.xlu0 %793
        %795 = vset.pattern.permute.xlu0 4
        %796 = vperm.xlu0 %795, %v367
        %v797 = vpop.permute.xlu0 %796
        %798 = vset.pattern.permute.xlu0 4
        %799 = vperm.xlu0 %798, %v368
        %v800 = vpop.permute.xlu0 %799
        %801 = vset.pattern.permute.xlu0 4
        %802 = vperm.xlu0 %801, %v369
        %v803 = vpop.permute.xlu0 %802
        %vm804 = vcmp.eq.s32.totalorder %v758, %v371
        %vm805 = vcmp.eq.s32.totalorder %v761, %v371
        %vm806 = vcmp.eq.s32.totalorder %v764, %v371
        %vm807 = vcmp.eq.s32.totalorder %v767, %v371
        %vm808 = vcmp.eq.s32.totalorder %v770, %v371
        %vm809 = vcmp.eq.s32.totalorder %v773, %v371
        %vm810 = vcmp.eq.s32.totalorder %v776, %v371
        %vm811 = vcmp.eq.s32.totalorder %v779, %v371
        %vm812 = vcmp.eq.s32.totalorder %v782, %v371
        %vm813 = vcmp.eq.s32.totalorder %v785, %v371
        %vm814 = vcmp.eq.s32.totalorder %v788, %v371
        %vm815 = vcmp.eq.s32.totalorder %v791, %v371
        %vm816 = vcmp.eq.s32.totalorder %v794, %v371
        %vm817 = vcmp.eq.s32.totalorder %v797, %v371
        %vm818 = vcmp.eq.s32.totalorder %v800, %v371
        %vm819 = vcmp.eq.s32.totalorder %v803, %v371
        %v820 = vsel %vm804, 1, 0
        %v821 = vsel %vm805, 1, 0
        %v822 = vsel %vm806, 1, 0
        %v823 = vsel %vm807, 1, 0
        %v824 = vsel %vm808, 1, 0
        %v825 = vsel %vm809, 1, 0
        %v826 = vsel %vm810, 1, 0
        %v827 = vsel %vm811, 1, 0
        %v828 = vsel %vm812, 1, 0
        %v829 = vsel %vm813, 1, 0
        %v830 = vsel %vm814, 1, 0
        %v831 = vsel %vm815, 1, 0
        %v832 = vsel %vm816, 1, 0
        %v833 = vsel %vm817, 1, 0
        %v834 = vsel %vm818, 1, 0
        %v835 = vsel %vm819, 1, 0
        %v836 = vcvt.s32.f32 %v820
        %v837 = vcvt.s32.f32 %v821
        %v838 = vcvt.s32.f32 %v822
        %v839 = vcvt.s32.f32 %v823
        %v840 = vcvt.s32.f32 %v824
        %v841 = vcvt.s32.f32 %v825
        %v842 = vcvt.s32.f32 %v826
        %v843 = vcvt.s32.f32 %v827
        %v844 = vcvt.s32.f32 %v828
        %v845 = vcvt.s32.f32 %v829
        %v846 = vcvt.s32.f32 %v830
        %v847 = vcvt.s32.f32 %v831
        %v848 = vcvt.s32.f32 %v832
        %v849 = vcvt.s32.f32 %v833
        %v850 = vcvt.s32.f32 %v834
        %v851 = vcvt.s32.f32 %v835
        %852 = vset.pattern.permute.xlu0 5
        %853 = vperm.xlu0 %852, %v354
        %v854 = vpop.permute.xlu0 %853
        %855 = vset.pattern.permute.xlu0 5
        %856 = vperm.xlu0 %855, %v355
        %v857 = vpop.permute.xlu0 %856
        %858 = vset.pattern.permute.xlu0 5
        %859 = vperm.xlu0 %858, %v356
        %v860 = vpop.permute.xlu0 %859
        %861 = vset.pattern.permute.xlu0 5
        %862 = vperm.xlu0 %861, %v357
        %v863 = vpop.permute.xlu0 %862
        %864 = vset.pattern.permute.xlu0 5
        %865 = vperm.xlu0 %864, %v358
        %v866 = vpop.permute.xlu0 %865
        %867 = vset.pattern.permute.xlu0 5
        %868 = vperm.xlu0 %867, %v359
        %v869 = vpop.permute.xlu0 %868
        %870 = vset.pattern.permute.xlu0 5
        %871 = vperm.xlu0 %870, %v360
        %v872 = vpop.permute.xlu0 %871
        %873 = vset.pattern.permute.xlu0 5
        %874 = vperm.xlu0 %873, %v361
        %v875 = vpop.permute.xlu0 %874
        %876 = vset.pattern.permute.xlu0 5
        %877 = vperm.xlu0 %876, %v362
        %v878 = vpop.permute.xlu0 %877
        %879 = vset.pattern.permute.xlu0 5
        %880 = vperm.xlu0 %879, %v363
        %v881 = vpop.permute.xlu0 %880
        %882 = vset.pattern.permute.xlu0 5
        %883 = vperm.xlu0 %882, %v364
        %v884 = vpop.permute.xlu0 %883
        %885 = vset.pattern.permute.xlu0 5
        %886 = vperm.xlu0 %885, %v365
        %v887 = vpop.permute.xlu0 %886
        %888 = vset.pattern.permute.xlu0 5
        %889 = vperm.xlu0 %888, %v366
        %v890 = vpop.permute.xlu0 %889
        %891 = vset.pattern.permute.xlu0 5
        %892 = vperm.xlu0 %891, %v367
        %v893 = vpop.permute.xlu0 %892
        %894 = vset.pattern.permute.xlu0 5
        %895 = vperm.xlu0 %894, %v368
        %v896 = vpop.permute.xlu0 %895
        %897 = vset.pattern.permute.xlu0 5
        %898 = vperm.xlu0 %897, %v369
        %v899 = vpop.permute.xlu0 %898
        %vm900 = vcmp.eq.s32.totalorder %v854, %v371
        %vm901 = vcmp.eq.s32.totalorder %v857, %v371
        %vm902 = vcmp.eq.s32.totalorder %v860, %v371
        %vm903 = vcmp.eq.s32.totalorder %v863, %v371
        %vm904 = vcmp.eq.s32.totalorder %v866, %v371
        %vm905 = vcmp.eq.s32.totalorder %v869, %v371
        %vm906 = vcmp.eq.s32.totalorder %v872, %v371
        %vm907 = vcmp.eq.s32.totalorder %v875, %v371
        %vm908 = vcmp.eq.s32.totalorder %v878, %v371
        %vm909 = vcmp.eq.s32.totalorder %v881, %v371
        %vm910 = vcmp.eq.s32.totalorder %v884, %v371
        %vm911 = vcmp.eq.s32.totalorder %v887, %v371
        %vm912 = vcmp.eq.s32.totalorder %v890, %v371
        %vm913 = vcmp.eq.s32.totalorder %v893, %v371
        %vm914 = vcmp.eq.s32.totalorder %v896, %v371
        %vm915 = vcmp.eq.s32.totalorder %v899, %v371
        %v916 = vsel %vm900, 1, 0
        %v917 = vsel %vm901, 1, 0
        %v918 = vsel %vm902, 1, 0
        %v919 = vsel %vm903, 1, 0
        %v920 = vsel %vm904, 1, 0
        %v921 = vsel %vm905, 1, 0
        %v922 = vsel %vm906, 1, 0
        %v923 = vsel %vm907, 1, 0
        %v924 = vsel %vm908, 1, 0
        %v925 = vsel %vm909, 1, 0
        %v926 = vsel %vm910, 1, 0
        %v927 = vsel %vm911, 1, 0
        %v928 = vsel %vm912, 1, 0
        %v929 = vsel %vm913, 1, 0
        %v930 = vsel %vm914, 1, 0
        %v931 = vsel %vm915, 1, 0
        %v932 = vcvt.s32.f32 %v916
        %v933 = vcvt.s32.f32 %v917
        %v934 = vcvt.s32.f32 %v918
        %v935 = vcvt.s32.f32 %v919
        %v936 = vcvt.s32.f32 %v920
        %v937 = vcvt.s32.f32 %v921
        %v938 = vcvt.s32.f32 %v922
        %v939 = vcvt.s32.f32 %v923
        %v940 = vcvt.s32.f32 %v924
        %v941 = vcvt.s32.f32 %v925
        %v942 = vcvt.s32.f32 %v926
        %v943 = vcvt.s32.f32 %v927
        %v944 = vcvt.s32.f32 %v928
        %v945 = vcvt.s32.f32 %v929
        %v946 = vcvt.s32.f32 %v930
        %v947 = vcvt.s32.f32 %v931
        %948 = vset.pattern.permute.xlu0 6
        %949 = vperm.xlu0 %948, %v354
        %v950 = vpop.permute.xlu0 %949
        %951 = vset.pattern.permute.xlu0 6
        %952 = vperm.xlu0 %951, %v355
        %v953 = vpop.permute.xlu0 %952
        %954 = vset.pattern.permute.xlu0 6
        %955 = vperm.xlu0 %954, %v356
        %v956 = vpop.permute.xlu0 %955
        %957 = vset.pattern.permute.xlu0 6
        %958 = vperm.xlu0 %957, %v357
        %v959 = vpop.permute.xlu0 %958
        %960 = vset.pattern.permute.xlu0 6
        %961 = vperm.xlu0 %960, %v358
        %v962 = vpop.permute.xlu0 %961
        %963 = vset.pattern.permute.xlu0 6
        %964 = vperm.xlu0 %963, %v359
        %v965 = vpop.permute.xlu0 %964
        %966 = vset.pattern.permute.xlu0 6
        %967 = vperm.xlu0 %966, %v360
        %v968 = vpop.permute.xlu0 %967
        %969 = vset.pattern.permute.xlu0 6
        %970 = vperm.xlu0 %969, %v361
        %v971 = vpop.permute.xlu0 %970
        %972 = vset.pattern.permute.xlu0 6
        %973 = vperm.xlu0 %972, %v362
        %v974 = vpop.permute.xlu0 %973
        %975 = vset.pattern.permute.xlu0 6
        %976 = vperm.xlu0 %975, %v363
        %v977 = vpop.permute.xlu0 %976
        %978 = vset.pattern.permute.xlu0 6
        %979 = vperm.xlu0 %978, %v364
        %v980 = vpop.permute.xlu0 %979
        %981 = vset.pattern.permute.xlu0 6
        %982 = vperm.xlu0 %981, %v365
        %v983 = vpop.permute.xlu0 %982
        %984 = vset.pattern.permute.xlu0 6
        %985 = vperm.xlu0 %984, %v366
        %v986 = vpop.permute.xlu0 %985
        %987 = vset.pattern.permute.xlu0 6
        %988 = vperm.xlu0 %987, %v367
        %v989 = vpop.permute.xlu0 %988
        %990 = vset.pattern.permute.xlu0 6
        %991 = vperm.xlu0 %990, %v368
        %v992 = vpop.permute.xlu0 %991
        %993 = vset.pattern.permute.xlu0 6
        %994 = vperm.xlu0 %993, %v369
        %v995 = vpop.permute.xlu0 %994
        %vm996 = vcmp.eq.s32.totalorder %v950, %v371
        %vm997 = vcmp.eq.s32.totalorder %v953, %v371
        %vm998 = vcmp.eq.s32.totalorder %v956, %v371
        %vm999 = vcmp.eq.s32.totalorder %v959, %v371
        %vm1000 = vcmp.eq.s32.totalorder %v962, %v371
        %vm1001 = vcmp.eq.s32.totalorder %v965, %v371
        %vm1002 = vcmp.eq.s32.totalorder %v968, %v371
        %vm1003 = vcmp.eq.s32.totalorder %v971, %v371
        %vm1004 = vcmp.eq.s32.totalorder %v974, %v371
        %vm1005 = vcmp.eq.s32.totalorder %v977, %v371
        %vm1006 = vcmp.eq.s32.totalorder %v980, %v371
        %vm1007 = vcmp.eq.s32.totalorder %v983, %v371
        %vm1008 = vcmp.eq.s32.totalorder %v986, %v371
        %vm1009 = vcmp.eq.s32.totalorder %v989, %v371
        %vm1010 = vcmp.eq.s32.totalorder %v992, %v371
        %vm1011 = vcmp.eq.s32.totalorder %v995, %v371
        %v1012 = vsel %vm996, 1, 0
        %v1013 = vsel %vm997, 1, 0
        %v1014 = vsel %vm998, 1, 0
        %v1015 = vsel %vm999, 1, 0
        %v1016 = vsel %vm1000, 1, 0
        %v1017 = vsel %vm1001, 1, 0
        %v1018 = vsel %vm1002, 1, 0
        %v1019 = vsel %vm1003, 1, 0
        %v1020 = vsel %vm1004, 1, 0
        %v1021 = vsel %vm1005, 1, 0
        %v1022 = vsel %vm1006, 1, 0
        %v1023 = vsel %vm1007, 1, 0
        %v1024 = vsel %vm1008, 1, 0
        %v1025 = vsel %vm1009, 1, 0
        %v1026 = vsel %vm1010, 1, 0
        %v1027 = vsel %vm1011, 1, 0
        %v1028 = vcvt.s32.f32 %v1012
        %v1029 = vcvt.s32.f32 %v1013
        %v1030 = vcvt.s32.f32 %v1014
        %v1031 = vcvt.s32.f32 %v1015
        %v1032 = vcvt.s32.f32 %v1016
        %v1033 = vcvt.s32.f32 %v1017
        %v1034 = vcvt.s32.f32 %v1018
        %v1035 = vcvt.s32.f32 %v1019
        %v1036 = vcvt.s32.f32 %v1020
        %v1037 = vcvt.s32.f32 %v1021
        %v1038 = vcvt.s32.f32 %v1022
        %v1039 = vcvt.s32.f32 %v1023
        %v1040 = vcvt.s32.f32 %v1024
        %v1041 = vcvt.s32.f32 %v1025
        %v1042 = vcvt.s32.f32 %v1026
        %v1043 = vcvt.s32.f32 %v1027
        %1044 = vset.pattern.permute.xlu0 7
        %1045 = vperm.xlu0 %1044, %v354
        %v1046 = vpop.permute.xlu0 %1045
        %1047 = vset.pattern.permute.xlu0 7
        %1048 = vperm.xlu0 %1047, %v355
        %v1049 = vpop.permute.xlu0 %1048
        %1050 = vset.pattern.permute.xlu0 7
        %1051 = vperm.xlu0 %1050, %v356
        %v1052 = vpop.permute.xlu0 %1051
        %1053 = vset.pattern.permute.xlu0 7
        %1054 = vperm.xlu0 %1053, %v357
        %v1055 = vpop.permute.xlu0 %1054
        %1056 = vset.pattern.permute.xlu0 7
        %1057 = vperm.xlu0 %1056, %v358
        %v1058 = vpop.permute.xlu0 %1057
        %1059 = vset.pattern.permute.xlu0 7
        %1060 = vperm.xlu0 %1059, %v359
        %v1061 = vpop.permute.xlu0 %1060
        %1062 = vset.pattern.permute.xlu0 7
        %1063 = vperm.xlu0 %1062, %v360
        %v1064 = vpop.permute.xlu0 %1063
        %1065 = vset.pattern.permute.xlu0 7
        %1066 = vperm.xlu0 %1065, %v361
        %v1067 = vpop.permute.xlu0 %1066
        %1068 = vset.pattern.permute.xlu0 7
        %1069 = vperm.xlu0 %1068, %v362
        %v1070 = vpop.permute.xlu0 %1069
        %1071 = vset.pattern.permute.xlu0 7
        %1072 = vperm.xlu0 %1071, %v363
        %v1073 = vpop.permute.xlu0 %1072
        %1074 = vset.pattern.permute.xlu0 7
        %1075 = vperm.xlu0 %1074, %v364
        %v1076 = vpop.permute.xlu0 %1075
        %1077 = vset.pattern.permute.xlu0 7
        %1078 = vperm.xlu0 %1077, %v365
        %v1079 = vpop.permute.xlu0 %1078
        %1080 = vset.pattern.permute.xlu0 7
        %1081 = vperm.xlu0 %1080, %v366
        %v1082 = vpop.permute.xlu0 %1081
        %1083 = vset.pattern.permute.xlu0 7
        %1084 = vperm.xlu0 %1083, %v367
        %v1085 = vpop.permute.xlu0 %1084
        %1086 = vset.pattern.permute.xlu0 7
        %1087 = vperm.xlu0 %1086, %v368
        %v1088 = vpop.permute.xlu0 %1087
        %1089 = vset.pattern.permute.xlu0 7
        %1090 = vperm.xlu0 %1089, %v369
        %v1091 = vpop.permute.xlu0 %1090
        %vm1092 = vcmp.eq.s32.totalorder %v1046, %v371
        %vm1093 = vcmp.eq.s32.totalorder %v1049, %v371
        %vm1094 = vcmp.eq.s32.totalorder %v1052, %v371
        %vm1095 = vcmp.eq.s32.totalorder %v1055, %v371
        %vm1096 = vcmp.eq.s32.totalorder %v1058, %v371
        %vm1097 = vcmp.eq.s32.totalorder %v1061, %v371
        %vm1098 = vcmp.eq.s32.totalorder %v1064, %v371
        %vm1099 = vcmp.eq.s32.totalorder %v1067, %v371
        %vm1100 = vcmp.eq.s32.totalorder %v1070, %v371
        %vm1101 = vcmp.eq.s32.totalorder %v1073, %v371
        %vm1102 = vcmp.eq.s32.totalorder %v1076, %v371
        %vm1103 = vcmp.eq.s32.totalorder %v1079, %v371
        %vm1104 = vcmp.eq.s32.totalorder %v1082, %v371
        %vm1105 = vcmp.eq.s32.totalorder %v1085, %v371
        %vm1106 = vcmp.eq.s32.totalorder %v1088, %v371
        %vm1107 = vcmp.eq.s32.totalorder %v1091, %v371
        %v1108 = vsel %vm1092, 1, 0
        %v1109 = vsel %vm1093, 1, 0
        %v1110 = vsel %vm1094, 1, 0
        %v1111 = vsel %vm1095, 1, 0
        %v1112 = vsel %vm1096, 1, 0
        %v1113 = vsel %vm1097, 1, 0
        %v1114 = vsel %vm1098, 1, 0
        %v1115 = vsel %vm1099, 1, 0
        %v1116 = vsel %vm1100, 1, 0
        %v1117 = vsel %vm1101, 1, 0
        %v1118 = vsel %vm1102, 1, 0
        %v1119 = vsel %vm1103, 1, 0
        %v1120 = vsel %vm1104, 1, 0
        %v1121 = vsel %vm1105, 1, 0
        %v1122 = vsel %vm1106, 1, 0
        %v1123 = vsel %vm1107, 1, 0
        %v1124 = vcvt.s32.f32 %v1108
        %v1125 = vcvt.s32.f32 %v1109
        %v1126 = vcvt.s32.f32 %v1110
        %v1127 = vcvt.s32.f32 %v1111
        %v1128 = vcvt.s32.f32 %v1112
        %v1129 = vcvt.s32.f32 %v1113
        %v1130 = vcvt.s32.f32 %v1114
        %v1131 = vcvt.s32.f32 %v1115
        %v1132 = vcvt.s32.f32 %v1116
        %v1133 = vcvt.s32.f32 %v1117
        %v1134 = vcvt.s32.f32 %v1118
        %v1135 = vcvt.s32.f32 %v1119
        %v1136 = vcvt.s32.f32 %v1120
        %v1137 = vcvt.s32.f32 %v1121
        %v1138 = vcvt.s32.f32 %v1122
        %v1139 = vcvt.s32.f32 %v1123
        %v1140 = vld [vmem:[%s2] sm:$0xff]
        %v1141 = vld [vmem:[%s2 + $0x8] sm:$0xff]
        %v1142 = vld [vmem:[%s2 + $0x10] sm:$0xff]
        %v1143 = vld [vmem:[%s2 + $0x18] sm:$0xff]
        %v1144 = vld [vmem:[%s2 + $0x20] sm:$0xff]
        %v1145 = vld [vmem:[%s2 + $0x28] sm:$0xff]
        %v1146 = vld [vmem:[%s2 + $0x30] sm:$0xff]
        %v1147 = vld [vmem:[%s2 + $0x38] sm:$0xff]
        %v1148 = vld [vmem:[%s2 + $0x40] sm:$0xff]
        %v1149 = vld [vmem:[%s2 + $0x48] sm:$0xff]
        %v1150 = vld [vmem:[%s2 + $0x50] sm:$0xff]
        %v1151 = vld [vmem:[%s2 + $0x58] sm:$0xff]
        %v1152 = vld [vmem:[%s2 + $0x60] sm:$0xff]
        %v1153 = vld [vmem:[%s2 + $0x68] sm:$0xff]
        %v1154 = vld [vmem:[%s2 + $0x70] sm:$0xff]
        %v1155 = vld [vmem:[%s2 + $0x78] sm:$0xff]
        %v1156 = vld [vmem:[%s2 + $0x80] sm:$0xff]
        %v1157 = vld [vmem:[%s2 + $0x88] sm:$0xff]
        %v1158 = vld [vmem:[%s2 + $0x90] sm:$0xff]
        %v1159 = vld [vmem:[%s2 + $0x98] sm:$0xff]
        %v1160 = vld [vmem:[%s2 + $0xa0] sm:$0xff]
        %v1161 = vld [vmem:[%s2 + $0xa8] sm:$0xff]
        %v1162 = vld [vmem:[%s2 + $0xb0] sm:$0xff]
        %v1163 = vld [vmem:[%s2 + $0xb8] sm:$0xff]
        %v1164 = vld [vmem:[%s2 + $0xc0] sm:$0xff]
        %v1165 = vld [vmem:[%s2 + $0xc8] sm:$0xff]
        %v1166 = vld [vmem:[%s2 + $0xd0] sm:$0xff]
        %v1167 = vld [vmem:[%s2 + $0xd8] sm:$0xff]
        %v1168 = vld [vmem:[%s2 + $0xe0] sm:$0xff]
        %v1169 = vld [vmem:[%s2 + $0xe8] sm:$0xff]
        %v1170 = vld [vmem:[%s2 + $0xf0] sm:$0xff]
        %v1171 = vld [vmem:[%s2 + $0xf8] sm:$0xff]
        %v1172 = vld [vmem:[%s2 + $0x100] sm:$0xff]
        %v1173 = vld [vmem:[%s2 + $0x108] sm:$0xff]
        %v1174 = vld [vmem:[%s2 + $0x110] sm:$0xff]
        %v1175 = vld [vmem:[%s2 + $0x118] sm:$0xff]
        %v1176 = vld [vmem:[%s2 + $0x120] sm:$0xff]
        %v1177 = vld [vmem:[%s2 + $0x128] sm:$0xff]
        %v1178 = vld [vmem:[%s2 + $0x130] sm:$0xff]
        %v1179 = vld [vmem:[%s2 + $0x138] sm:$0xff]
        %v1180 = vld [vmem:[%s2 + $0x140] sm:$0xff]
        %v1181 = vld [vmem:[%s2 + $0x148] sm:$0xff]
        %v1182 = vld [vmem:[%s2 + $0x150] sm:$0xff]
        %v1183 = vld [vmem:[%s2 + $0x158] sm:$0xff]
        %v1184 = vld [vmem:[%s2 + $0x160] sm:$0xff]
        %v1185 = vld [vmem:[%s2 + $0x168] sm:$0xff]
        %v1186 = vld [vmem:[%s2 + $0x170] sm:$0xff]
        %v1187 = vld [vmem:[%s2 + $0x178] sm:$0xff]
        %v1188 = vld [vmem:[%s2 + $0x180] sm:$0xff]
        %v1189 = vld [vmem:[%s2 + $0x188] sm:$0xff]
        %v1190 = vld [vmem:[%s2 + $0x190] sm:$0xff]
        %v1191 = vld [vmem:[%s2 + $0x198] sm:$0xff]
        %v1192 = vld [vmem:[%s2 + $0x1a0] sm:$0xff]
        %v1193 = vld [vmem:[%s2 + $0x1a8] sm:$0xff]
        %v1194 = vld [vmem:[%s2 + $0x1b0] sm:$0xff]
        %v1195 = vld [vmem:[%s2 + $0x1b8] sm:$0xff]
        %v1196 = vld [vmem:[%s2 + $0x1c0] sm:$0xff]
        %v1197 = vld [vmem:[%s2 + $0x1c8] sm:$0xff]
        %v1198 = vld [vmem:[%s2 + $0x1d0] sm:$0xff]
        %v1199 = vld [vmem:[%s2 + $0x1d8] sm:$0xff]
        %v1200 = vld [vmem:[%s2 + $0x1e0] sm:$0xff]
        %v1201 = vld [vmem:[%s2 + $0x1e8] sm:$0xff]
        %v1202 = vld [vmem:[%s2 + $0x1f0] sm:$0xff]
        %v1203 = vld [vmem:[%s2 + $0x1f8] sm:$0xff]
        %v1204 = vld [vmem:[%s2 + $0x200] sm:$0xff]
        %v1205 = vld [vmem:[%s2 + $0x208] sm:$0xff]
        %v1206 = vld [vmem:[%s2 + $0x210] sm:$0xff]
        %v1207 = vld [vmem:[%s2 + $0x218] sm:$0xff]
        %v1208 = vld [vmem:[%s2 + $0x220] sm:$0xff]
        %v1209 = vld [vmem:[%s2 + $0x228] sm:$0xff]
        %v1210 = vld [vmem:[%s2 + $0x230] sm:$0xff]
        %v1211 = vld [vmem:[%s2 + $0x238] sm:$0xff]
        %v1212 = vld [vmem:[%s2 + $0x240] sm:$0xff]
        %v1213 = vld [vmem:[%s2 + $0x248] sm:$0xff]
        %v1214 = vld [vmem:[%s2 + $0x250] sm:$0xff]
        %v1215 = vld [vmem:[%s2 + $0x258] sm:$0xff]
        %v1216 = vld [vmem:[%s2 + $0x260] sm:$0xff]
        %v1217 = vld [vmem:[%s2 + $0x268] sm:$0xff]
        %v1218 = vld [vmem:[%s2 + $0x270] sm:$0xff]
        %v1219 = vld [vmem:[%s2 + $0x278] sm:$0xff]
        %v1220 = vld [vmem:[%s2 + $0x280] sm:$0xff]
        %v1221 = vld [vmem:[%s2 + $0x288] sm:$0xff]
        %v1222 = vld [vmem:[%s2 + $0x290] sm:$0xff]
        %v1223 = vld [vmem:[%s2 + $0x298] sm:$0xff]
        %v1224 = vld [vmem:[%s2 + $0x2a0] sm:$0xff]
        %v1225 = vld [vmem:[%s2 + $0x2a8] sm:$0xff]
        %v1226 = vld [vmem:[%s2 + $0x2b0] sm:$0xff]
        %v1227 = vld [vmem:[%s2 + $0x2b8] sm:$0xff]
        %v1228 = vld [vmem:[%s2 + $0x2c0] sm:$0xff]
        %v1229 = vld [vmem:[%s2 + $0x2c8] sm:$0xff]
        %v1230 = vld [vmem:[%s2 + $0x2d0] sm:$0xff]
        %v1231 = vld [vmem:[%s2 + $0x2d8] sm:$0xff]
        %v1232 = vld [vmem:[%s2 + $0x2e0] sm:$0xff]
        %v1233 = vld [vmem:[%s2 + $0x2e8] sm:$0xff]
        %v1234 = vld [vmem:[%s2 + $0x2f0] sm:$0xff]
        %v1235 = vld [vmem:[%s2 + $0x2f8] sm:$0xff]
        %v1236 = vld [vmem:[%s2 + $0x300] sm:$0xff]
        %v1237 = vld [vmem:[%s2 + $0x308] sm:$0xff]
        %v1238 = vld [vmem:[%s2 + $0x310] sm:$0xff]
        %v1239 = vld [vmem:[%s2 + $0x318] sm:$0xff]
        %v1240 = vld [vmem:[%s2 + $0x320] sm:$0xff]
        %v1241 = vld [vmem:[%s2 + $0x328] sm:$0xff]
        %v1242 = vld [vmem:[%s2 + $0x330] sm:$0xff]
        %v1243 = vld [vmem:[%s2 + $0x338] sm:$0xff]
        %v1244 = vld [vmem:[%s2 + $0x340] sm:$0xff]
        %v1245 = vld [vmem:[%s2 + $0x348] sm:$0xff]
        %v1246 = vld [vmem:[%s2 + $0x350] sm:$0xff]
        %v1247 = vld [vmem:[%s2 + $0x358] sm:$0xff]
        %v1248 = vld [vmem:[%s2 + $0x360] sm:$0xff]
        %v1249 = vld [vmem:[%s2 + $0x368] sm:$0xff]
        %v1250 = vld [vmem:[%s2 + $0x370] sm:$0xff]
        %v1251 = vld [vmem:[%s2 + $0x378] sm:$0xff]
        %v1252 = vld [vmem:[%s2 + $0x380] sm:$0xff]
        %v1253 = vld [vmem:[%s2 + $0x388] sm:$0xff]
        %v1254 = vld [vmem:[%s2 + $0x390] sm:$0xff]
        %v1255 = vld [vmem:[%s2 + $0x398] sm:$0xff]
        %v1256 = vld [vmem:[%s2 + $0x3a0] sm:$0xff]
        %v1257 = vld [vmem:[%s2 + $0x3a8] sm:$0xff]
        %v1258 = vld [vmem:[%s2 + $0x3b0] sm:$0xff]
        %v1259 = vld [vmem:[%s2 + $0x3b8] sm:$0xff]
        %v1260 = vld [vmem:[%s2 + $0x3c0] sm:$0xff]
        %v1261 = vld [vmem:[%s2 + $0x3c8] sm:$0xff]
        %v1262 = vld [vmem:[%s2 + $0x3d0] sm:$0xff]
        %v1263 = vld [vmem:[%s2 + $0x3d8] sm:$0xff]
        %v1264 = vld [vmem:[%s2 + $0x3e0] sm:$0xff]
        %v1265 = vld [vmem:[%s2 + $0x3e8] sm:$0xff]
        %v1266 = vld [vmem:[%s2 + $0x3f0] sm:$0xff]
        %v1267 = vld [vmem:[%s2 + $0x3f8] sm:$0xff]
        %1268 = vmatprep.subr.mxu0 0.0
        %1269 = vmatpush1.msra.mxu0 %v1155
        %1270 = vmatprep.subr.mxu0 0.0
        %1271 = vmatpush1.msra.mxu0 %v1154
        %1272 = vmatprep.subr.mxu0 0.0
        %1273 = vmatpush1.msra.mxu0 %v1153
        %1274 = vmatprep.subr.mxu0 0.0
        %1275 = vmatpush1.msra.mxu0 %v1152
        %1276 = vmatprep.subr.mxu0 0.0
        %1277 = vmatpush1.msra.mxu0 %v1151
        %1278 = vmatprep.subr.mxu0 0.0
        %1279 = vmatpush1.msra.mxu0 %v1150
        %1280 = vmatprep.subr.mxu0 0.0
        %1281 = vmatpush1.msra.mxu0 %v1149
        %1282 = vmatprep.subr.mxu0 0.0
        %1283 = vmatpush1.msra.mxu0 %v1148
        %1284 = vmatprep.subr.mxu0 0.0
        %1285 = vmatpush1.msra.mxu0 %v1147
        %1286 = vmatprep.subr.mxu0 0.0
        %1287 = vmatpush1.msra.mxu0 %v1146
        %1288 = vmatprep.subr.mxu0 0.0
        %1289 = vmatpush1.msra.mxu0 %v1145
        %1290 = vmatprep.subr.mxu0 0.0
        %1291 = vmatpush1.msra.mxu0 %v1144
        %1292 = vmatprep.subr.mxu0 0.0
        %1293 = vmatpush1.msra.mxu0 %v1143
        %1294 = vmatprep.subr.mxu0 0.0
        %1295 = vmatpush1.msra.mxu0 %v1142
        %1296 = vmatprep.subr.mxu0 0.0
        %1297 = vmatpush1.msra.mxu0 %v1141
        %1298 = vmatprep.subr.mxu0 0.0
        %1299 = vmatpush1.msra.mxu0 %v1140
        %1300 = vmatprep.subr.mxu0 0.0
        %1301 = vmatpush2.msra.mxu0 %v1171
        %1302 = vmatprep.subr.mxu0 0.0
        %1303 = vmatpush2.msra.mxu0 %v1170
        %1304 = vmatprep.subr.mxu0 0.0
        %1305 = vmatpush2.msra.mxu0 %v1169
        %1306 = vmatprep.subr.mxu0 0.0
        %1307 = vmatpush2.msra.mxu0 %v1168
        %1308 = vmatprep.subr.mxu0 0.0
        %1309 = vmatpush2.msra.mxu0 %v1167
        %1310 = vmatprep.subr.mxu0 0.0
        %1311 = vmatpush2.msra.mxu0 %v1166
        %1312 = vmatprep.subr.mxu0 0.0
        %1313 = vmatpush2.msra.mxu0 %v1165
        %1314 = vmatprep.subr.mxu0 0.0
        %1315 = vmatpush2.msra.mxu0 %v1164
        %1316 = vmatprep.subr.mxu0 0.0
        %1317 = vmatpush2.msra.mxu0 %v1163
        %1318 = vmatprep.subr.mxu0 0.0
        %1319 = vmatpush2.msra.mxu0 %v1162
        %1320 = vmatprep.subr.mxu0 0.0
        %1321 = vmatpush2.msra.mxu0 %v1161
        %1322 = vmatprep.subr.mxu0 0.0
        %1323 = vmatpush2.msra.mxu0 %v1160
        %1324 = vmatprep.subr.mxu0 0.0
        %1325 = vmatpush2.msra.mxu0 %v1159
        %1326 = vmatprep.subr.mxu0 0.0
        %1327 = vmatpush2.msra.mxu0 %v1158
        %1328 = vmatprep.subr.mxu0 0.0
        %1329 = vmatpush2.msra.mxu0 %v1157
        %1330 = vmatprep.subr.mxu0 0.0
        %1331 = vmatpush2.msra.mxu0 %v1156
        %1332 = vmatprep.mubr.f32.mxu0 %v548
        %1333 = vmatmul.mubr.f32.gmra.mxu0 %v452
        %v1334 = vpop.f32.mrf.mxu0
        %v1335 = vadd.f32 0.0, %v1334
        %v1336 = vpop.f32.mrf.mxu0
        %1337 = vmatprep.mubr.f32.mxu0 %v549
        %1338 = vmatmul.mubr.f32.gmra.mxu0 %v453
        %v1339 = vpop.f32.mrf.mxu0
        %v1340 = vadd.f32 0.0, %v1339
        %v1341 = vpop.f32.mrf.mxu0
        %1342 = vmatprep.mubr.f32.mxu0 %v550
        %1343 = vmatmul.mubr.f32.gmra.mxu0 %v454
        %v1344 = vpop.f32.mrf.mxu0
        %v1345 = vadd.f32 0.0, %v1344
        %v1346 = vpop.f32.mrf.mxu0
        %1347 = vmatprep.mubr.f32.mxu0 %v551
        %1348 = vmatmul.mubr.f32.gmra.mxu0 %v455
        %v1349 = vpop.f32.mrf.mxu0
        %v1350 = vadd.f32 0.0, %v1349
        %v1351 = vpop.f32.mrf.mxu0
        %1352 = vmatprep.mubr.f32.mxu0 %v552
        %1353 = vmatmul.mubr.f32.gmra.mxu0 %v456
        %v1354 = vpop.f32.mrf.mxu0
        %v1355 = vadd.f32 0.0, %v1354
        %v1356 = vpop.f32.mrf.mxu0
        %1357 = vmatprep.mubr.f32.mxu0 %v553
        %1358 = vmatmul.mubr.f32.gmra.mxu0 %v457
        %v1359 = vpop.f32.mrf.mxu0
        %v1360 = vadd.f32 0.0, %v1359
        %v1361 = vpop.f32.mrf.mxu0
        %1362 = vmatprep.mubr.f32.mxu0 %v554
        %1363 = vmatmul.mubr.f32.gmra.mxu0 %v458
        %v1364 = vpop.f32.mrf.mxu0
        %v1365 = vadd.f32 0.0, %v1364
        %v1366 = vpop.f32.mrf.mxu0
        %1367 = vmatprep.mubr.f32.mxu0 %v555
        %1368 = vmatmul.mubr.f32.gmra.mxu0 %v459
        %v1369 = vpop.f32.mrf.mxu0
        %v1370 = vadd.f32 0.0, %v1369
        %v1371 = vpop.f32.mrf.mxu0
        %1372 = vmatprep.mubr.f32.mxu0 %v556
        %1373 = vmatmul.mubr.f32.gmra.mxu0 %v460
        %v1374 = vpop.f32.mrf.mxu0
        %v1375 = vadd.f32 0.0, %v1374
        %v1376 = vpop.f32.mrf.mxu0
        %1377 = vmatprep.mubr.f32.mxu0 %v557
        %1378 = vmatmul.mubr.f32.gmra.mxu0 %v461
        %v1379 = vpop.f32.mrf.mxu0
        %v1380 = vadd.f32 0.0, %v1379
        %v1381 = vpop.f32.mrf.mxu0
        %1382 = vmatprep.mubr.f32.mxu0 %v558
        %1383 = vmatmul.mubr.f32.gmra.mxu0 %v462
        %v1384 = vpop.f32.mrf.mxu0
        %v1385 = vadd.f32 0.0, %v1384
        %v1386 = vpop.f32.mrf.mxu0
        %1387 = vmatprep.mubr.f32.mxu0 %v559
        %1388 = vmatmul.mubr.f32.gmra.mxu0 %v463
        %v1389 = vpop.f32.mrf.mxu0
        %v1390 = vadd.f32 0.0, %v1389
        %v1391 = vpop.f32.mrf.mxu0
        %1392 = vmatprep.mubr.f32.mxu0 %v560
        %1393 = vmatmul.mubr.f32.gmra.mxu0 %v464
        %v1394 = vpop.f32.mrf.mxu0
        %v1395 = vadd.f32 0.0, %v1394
        %v1396 = vpop.f32.mrf.mxu0
        %1397 = vmatprep.mubr.f32.mxu0 %v561
        %1398 = vmatmul.mubr.f32.gmra.mxu0 %v465
        %v1399 = vpop.f32.mrf.mxu0
        %v1400 = vadd.f32 0.0, %v1399
        %v1401 = vpop.f32.mrf.mxu0
        %1402 = vmatprep.mubr.f32.mxu0 %v562
        %1403 = vmatmul.mubr.f32.gmra.mxu0 %v466
        %v1404 = vpop.f32.mrf.mxu0
        %v1405 = vadd.f32 0.0, %v1404
        %v1406 = vpop.f32.mrf.mxu0
        %1407 = vmatprep.mubr.f32.mxu0 %v563
        %1408 = vmatmul.mubr.f32.gmra.mxu0 %v467
        %v1409 = vpop.f32.mrf.mxu0
        %v1410 = vadd.f32 0.0, %v1409
        %v1411 = vpop.f32.mrf.mxu0
        %1412 = vdwg.mxu0
        %1413 = vmatprep.subr.mxu0 0.0
        %1414 = vmatpush1.msra.mxu0 %v1187
        %1415 = vmatprep.subr.mxu0 0.0
        %1416 = vmatpush1.msra.mxu0 %v1186
        %1417 = vmatprep.subr.mxu0 0.0
        %1418 = vmatpush1.msra.mxu0 %v1185
        %1419 = vmatprep.subr.mxu0 0.0
        %1420 = vmatpush1.msra.mxu0 %v1184
        %1421 = vmatprep.subr.mxu0 0.0
        %1422 = vmatpush1.msra.mxu0 %v1183
        %1423 = vmatprep.subr.mxu0 0.0
        %1424 = vmatpush1.msra.mxu0 %v1182
        %1425 = vmatprep.subr.mxu0 0.0
        %1426 = vmatpush1.msra.mxu0 %v1181
        %1427 = vmatprep.subr.mxu0 0.0
        %1428 = vmatpush1.msra.mxu0 %v1180
        %1429 = vmatprep.subr.mxu0 0.0
        %1430 = vmatpush1.msra.mxu0 %v1179
        %1431 = vmatprep.subr.mxu0 0.0
        %1432 = vmatpush1.msra.mxu0 %v1178
        %1433 = vmatprep.subr.mxu0 0.0
        %1434 = vmatpush1.msra.mxu0 %v1177
        %1435 = vmatprep.subr.mxu0 0.0
        %1436 = vmatpush1.msra.mxu0 %v1176
        %1437 = vmatprep.subr.mxu0 0.0
        %1438 = vmatpush1.msra.mxu0 %v1175
        %1439 = vmatprep.subr.mxu0 0.0
        %1440 = vmatpush1.msra.mxu0 %v1174
        %1441 = vmatprep.subr.mxu0 0.0
        %1442 = vmatpush1.msra.mxu0 %v1173
        %1443 = vmatprep.subr.mxu0 0.0
        %1444 = vmatpush1.msra.mxu0 %v1172
        %1445 = vmatprep.subr.mxu0 0.0
        %1446 = vmatpush2.msra.mxu0 %v1203
        %1447 = vmatprep.subr.mxu0 0.0
        %1448 = vmatpush2.msra.mxu0 %v1202
        %1449 = vmatprep.subr.mxu0 0.0
        %1450 = vmatpush2.msra.mxu0 %v1201
        %1451 = vmatprep.subr.mxu0 0.0
        %1452 = vmatpush2.msra.mxu0 %v1200
        %1453 = vmatprep.subr.mxu0 0.0
        %1454 = vmatpush2.msra.mxu0 %v1199
        %1455 = vmatprep.subr.mxu0 0.0
        %1456 = vmatpush2.msra.mxu0 %v1198
        %1457 = vmatprep.subr.mxu0 0.0
        %1458 = vmatpush2.msra.mxu0 %v1197
        %1459 = vmatprep.subr.mxu0 0.0
        %1460 = vmatpush2.msra.mxu0 %v1196
        %1461 = vmatprep.subr.mxu0 0.0
        %1462 = vmatpush2.msra.mxu0 %v1195
        %1463 = vmatprep.subr.mxu0 0.0
        %1464 = vmatpush2.msra.mxu0 %v1194
        %1465 = vmatprep.subr.mxu0 0.0
        %1466 = vmatpush2.msra.mxu0 %v1193
        %1467 = vmatprep.subr.mxu0 0.0
        %1468 = vmatpush2.msra.mxu0 %v1192
        %1469 = vmatprep.subr.mxu0 0.0
        %1470 = vmatpush2.msra.mxu0 %v1191
        %1471 = vmatprep.subr.mxu0 0.0
        %1472 = vmatpush2.msra.mxu0 %v1190
        %1473 = vmatprep.subr.mxu0 0.0
        %1474 = vmatpush2.msra.mxu0 %v1189
        %1475 = vmatprep.subr.mxu0 0.0
        %1476 = vmatpush2.msra.mxu0 %v1188
        %1477 = vmatprep.mubr.f32.mxu0 %v740
        %1478 = vmatmul.mubr.f32.gmra.mxu0 %v644
        %v1479 = vpop.f32.mrf.mxu0
        %v1480 = vadd.f32 %v1335, %v1479
        %v1481 = vpop.f32.mrf.mxu0
        %1482 = vmatprep.mubr.f32.mxu0 %v741
        %1483 = vmatmul.mubr.f32.gmra.mxu0 %v645
        %v1484 = vpop.f32.mrf.mxu0
        %v1485 = vadd.f32 %v1340, %v1484
        %v1486 = vpop.f32.mrf.mxu0
        %1487 = vmatprep.mubr.f32.mxu0 %v742
        %1488 = vmatmul.mubr.f32.gmra.mxu0 %v646
        %v1489 = vpop.f32.mrf.mxu0
        %v1490 = vadd.f32 %v1345, %v1489
        %v1491 = vpop.f32.mrf.mxu0
        %1492 = vmatprep.mubr.f32.mxu0 %v743
        %1493 = vmatmul.mubr.f32.gmra.mxu0 %v647
        %v1494 = vpop.f32.mrf.mxu0
        %v1495 = vadd.f32 %v1350, %v1494
        %v1496 = vpop.f32.mrf.mxu0
        %1497 = vmatprep.mubr.f32.mxu0 %v744
        %1498 = vmatmul.mubr.f32.gmra.mxu0 %v648
        %v1499 = vpop.f32.mrf.mxu0
        %v1500 = vadd.f32 %v1355, %v1499
        %v1501 = vpop.f32.mrf.mxu0
        %1502 = vmatprep.mubr.f32.mxu0 %v745
        %1503 = vmatmul.mubr.f32.gmra.mxu0 %v649
        %v1504 = vpop.f32.mrf.mxu0
        %v1505 = vadd.f32 %v1360, %v1504
        %v1506 = vpop.f32.mrf.mxu0
        %1507 = vmatprep.mubr.f32.mxu0 %v746
        %1508 = vmatmul.mubr.f32.gmra.mxu0 %v650
        %v1509 = vpop.f32.mrf.mxu0
        %v1510 = vadd.f32 %v1365, %v1509
        %v1511 = vpop.f32.mrf.mxu0
        %1512 = vmatprep.mubr.f32.mxu0 %v747
        %1513 = vmatmul.mubr.f32.gmra.mxu0 %v651
        %v1514 = vpop.f32.mrf.mxu0
        %v1515 = vadd.f32 %v1370, %v1514
        %v1516 = vpop.f32.mrf.mxu0
        %1517 = vmatprep.mubr.f32.mxu0 %v748
        %1518 = vmatmul.mubr.f32.gmra.mxu0 %v652
        %v1519 = vpop.f32.mrf.mxu0
        %v1520 = vadd.f32 %v1375, %v1519
        %v1521 = vpop.f32.mrf.mxu0
        %1522 = vmatprep.mubr.f32.mxu0 %v749
        %1523 = vmatmul.mubr.f32.gmra.mxu0 %v653
        %v1524 = vpop.f32.mrf.mxu0
        %v1525 = vadd.f32 %v1380, %v1524
        %v1526 = vpop.f32.mrf.mxu0
        %1527 = vmatprep.mubr.f32.mxu0 %v750
        %1528 = vmatmul.mubr.f32.gmra.mxu0 %v654
        %v1529 = vpop.f32.mrf.mxu0
        %v1530 = vadd.f32 %v1385, %v1529
        %v1531 = vpop.f32.mrf.mxu0
        %1532 = vmatprep.mubr.f32.mxu0 %v751
        %1533 = vmatmul.mubr.f32.gmra.mxu0 %v655
        %v1534 = vpop.f32.mrf.mxu0
        %v1535 = vadd.f32 %v1390, %v1534
        %v1536 = vpop.f32.mrf.mxu0
        %1537 = vmatprep.mubr.f32.mxu0 %v752
        %1538 = vmatmul.mubr.f32.gmra.mxu0 %v656
        %v1539 = vpop.f32.mrf.mxu0
        %v1540 = vadd.f32 %v1395, %v1539
        %v1541 = vpop.f32.mrf.mxu0
        %1542 = vmatprep.mubr.f32.mxu0 %v753
        %1543 = vmatmul.mubr.f32.gmra.mxu0 %v657
        %v1544 = vpop.f32.mrf.mxu0
        %v1545 = vadd.f32 %v1400, %v1544
        %v1546 = vpop.f32.mrf.mxu0
        %1547 = vmatprep.mubr.f32.mxu0 %v754
        %1548 = vmatmul.mubr.f32.gmra.mxu0 %v658
        %v1549 = vpop.f32.mrf.mxu0
        %v1550 = vadd.f32 %v1405, %v1549
        %v1551 = vpop.f32.mrf.mxu0
        %1552 = vmatprep.mubr.f32.mxu0 %v755
        %1553 = vmatmul.mubr.f32.gmra.mxu0 %v659
        %v1554 = vpop.f32.mrf.mxu0
        %v1555 = vadd.f32 %v1410, %v1554
        %v1556 = vpop.f32.mrf.mxu0
        %1557 = vdwg.mxu0
        %1558 = vmatprep.subr.mxu0 0.0
        %1559 = vmatpush1.msra.mxu0 %v1219
        %1560 = vmatprep.subr.mxu0 0.0
        %1561 = vmatpush1.msra.mxu0 %v1218
        %1562 = vmatprep.subr.mxu0 0.0
        %1563 = vmatpush1.msra.mxu0 %v1217
        %1564 = vmatprep.subr.mxu0 0.0
        %1565 = vmatpush1.msra.mxu0 %v1216
        %1566 = vmatprep.subr.mxu0 0.0
        %1567 = vmatpush1.msra.mxu0 %v1215
        %1568 = vmatprep.subr.mxu0 0.0
        %1569 = vmatpush1.msra.mxu0 %v1214
        %1570 = vmatprep.subr.mxu0 0.0
        %1571 = vmatpush1.msra.mxu0 %v1213
        %1572 = vmatprep.subr.mxu0 0.0
        %1573 = vmatpush1.msra.mxu0 %v1212
        %1574 = vmatprep.subr.mxu0 0.0
        %1575 = vmatpush1.msra.mxu0 %v1211
        %1576 = vmatprep.subr.mxu0 0.0
        %1577 = vmatpush1.msra.mxu0 %v1210
        %1578 = vmatprep.subr.mxu0 0.0
        %1579 = vmatpush1.msra.mxu0 %v1209
        %1580 = vmatprep.subr.mxu0 0.0
        %1581 = vmatpush1.msra.mxu0 %v1208
        %1582 = vmatprep.subr.mxu0 0.0
        %1583 = vmatpush1.msra.mxu0 %v1207
        %1584 = vmatprep.subr.mxu0 0.0
        %1585 = vmatpush1.msra.mxu0 %v1206
        %1586 = vmatprep.subr.mxu0 0.0
        %1587 = vmatpush1.msra.mxu0 %v1205
        %1588 = vmatprep.subr.mxu0 0.0
        %1589 = vmatpush1.msra.mxu0 %v1204
        %1590 = vmatprep.subr.mxu0 0.0
        %1591 = vmatpush2.msra.mxu0 %v1235
        %1592 = vmatprep.subr.mxu0 0.0
        %1593 = vmatpush2.msra.mxu0 %v1234
        %1594 = vmatprep.subr.mxu0 0.0
        %1595 = vmatpush2.msra.mxu0 %v1233
        %1596 = vmatprep.subr.mxu0 0.0
        %1597 = vmatpush2.msra.mxu0 %v1232
        %1598 = vmatprep.subr.mxu0 0.0
        %1599 = vmatpush2.msra.mxu0 %v1231
        %1600 = vmatprep.subr.mxu0 0.0
        %1601 = vmatpush2.msra.mxu0 %v1230
        %1602 = vmatprep.subr.mxu0 0.0
        %1603 = vmatpush2.msra.mxu0 %v1229
        %1604 = vmatprep.subr.mxu0 0.0
        %1605 = vmatpush2.msra.mxu0 %v1228
        %1606 = vmatprep.subr.mxu0 0.0
        %1607 = vmatpush2.msra.mxu0 %v1227
        %1608 = vmatprep.subr.mxu0 0.0
        %1609 = vmatpush2.msra.mxu0 %v1226
        %1610 = vmatprep.subr.mxu0 0.0
        %1611 = vmatpush2.msra.mxu0 %v1225
        %1612 = vmatprep.subr.mxu0 0.0
        %1613 = vmatpush2.msra.mxu0 %v1224
        %1614 = vmatprep.subr.mxu0 0.0
        %1615 = vmatpush2.msra.mxu0 %v1223
        %1616 = vmatprep.subr.mxu0 0.0
        %1617 = vmatpush2.msra.mxu0 %v1222
        %1618 = vmatprep.subr.mxu0 0.0
        %1619 = vmatpush2.msra.mxu0 %v1221
        %1620 = vmatprep.subr.mxu0 0.0
        %1621 = vmatpush2.msra.mxu0 %v1220
        %1622 = vmatprep.mubr.f32.mxu0 %v932
        %1623 = vmatmul.mubr.f32.gmra.mxu0 %v836
        %v1624 = vpop.f32.mrf.mxu0
        %v1625 = vadd.f32 %v1480, %v1624
        %v1626 = vpop.f32.mrf.mxu0
        %1627 = vmatprep.mubr.f32.mxu0 %v933
        %1628 = vmatmul.mubr.f32.gmra.mxu0 %v837
        %v1629 = vpop.f32.mrf.mxu0
        %v1630 = vadd.f32 %v1485, %v1629
        %v1631 = vpop.f32.mrf.mxu0
        %1632 = vmatprep.mubr.f32.mxu0 %v934
        %1633 = vmatmul.mubr.f32.gmra.mxu0 %v838
        %v1634 = vpop.f32.mrf.mxu0
        %v1635 = vadd.f32 %v1490, %v1634
        %v1636 = vpop.f32.mrf.mxu0
        %1637 = vmatprep.mubr.f32.mxu0 %v935
        %1638 = vmatmul.mubr.f32.gmra.mxu0 %v839
        %v1639 = vpop.f32.mrf.mxu0
        %v1640 = vadd.f32 %v1495, %v1639
        %v1641 = vpop.f32.mrf.mxu0
        %1642 = vmatprep.mubr.f32.mxu0 %v936
        %1643 = vmatmul.mubr.f32.gmra.mxu0 %v840
        %v1644 = vpop.f32.mrf.mxu0
        %v1645 = vadd.f32 %v1500, %v1644
        %v1646 = vpop.f32.mrf.mxu0
        %1647 = vmatprep.mubr.f32.mxu0 %v937
        %1648 = vmatmul.mubr.f32.gmra.mxu0 %v841
        %v1649 = vpop.f32.mrf.mxu0
        %v1650 = vadd.f32 %v1505, %v1649
        %v1651 = vpop.f32.mrf.mxu0
        %1652 = vmatprep.mubr.f32.mxu0 %v938
        %1653 = vmatmul.mubr.f32.gmra.mxu0 %v842
        %v1654 = vpop.f32.mrf.mxu0
        %v1655 = vadd.f32 %v1510, %v1654
        %v1656 = vpop.f32.mrf.mxu0
        %1657 = vmatprep.mubr.f32.mxu0 %v939
        %1658 = vmatmul.mubr.f32.gmra.mxu0 %v843
        %v1659 = vpop.f32.mrf.mxu0
        %v1660 = vadd.f32 %v1515, %v1659
        %v1661 = vpop.f32.mrf.mxu0
        %1662 = vmatprep.mubr.f32.mxu0 %v940
        %1663 = vmatmul.mubr.f32.gmra.mxu0 %v844
        %v1664 = vpop.f32.mrf.mxu0
        %v1665 = vadd.f32 %v1520, %v1664
        %v1666 = vpop.f32.mrf.mxu0
        %1667 = vmatprep.mubr.f32.mxu0 %v941
        %1668 = vmatmul.mubr.f32.gmra.mxu0 %v845
        %v1669 = vpop.f32.mrf.mxu0
        %v1670 = vadd.f32 %v1525, %v1669
        %v1671 = vpop.f32.mrf.mxu0
        %1672 = vmatprep.mubr.f32.mxu0 %v942
        %1673 = vmatmul.mubr.f32.gmra.mxu0 %v846
        %v1674 = vpop.f32.mrf.mxu0
        %v1675 = vadd.f32 %v1530, %v1674
        %v1676 = vpop.f32.mrf.mxu0
        %1677 = vmatprep.mubr.f32.mxu0 %v943
        %1678 = vmatmul.mubr.f32.gmra.mxu0 %v847
        %v1679 = vpop.f32.mrf.mxu0
        %v1680 = vadd.f32 %v1535, %v1679
        %v1681 = vpop.f32.mrf.mxu0
        %1682 = vmatprep.mubr.f32.mxu0 %v944
        %1683 = vmatmul.mubr.f32.gmra.mxu0 %v848
        %v1684 = vpop.f32.mrf.mxu0
        %v1685 = vadd.f32 %v1540, %v1684
        %v1686 = vpop.f32.mrf.mxu0
        %1687 = vmatprep.mubr.f32.mxu0 %v945
        %1688 = vmatmul.mubr.f32.gmra.mxu0 %v849
        %v1689 = vpop.f32.mrf.mxu0
        %v1690 = vadd.f32 %v1545, %v1689
        %v1691 = vpop.f32.mrf.mxu0
        %1692 = vmatprep.mubr.f32.mxu0 %v946
        %1693 = vmatmul.mubr.f32.gmra.mxu0 %v850
        %v1694 = vpop.f32.mrf.mxu0
        %v1695 = vadd.f32 %v1550, %v1694
        %v1696 = vpop.f32.mrf.mxu0
        %1697 = vmatprep.mubr.f32.mxu0 %v947
        %1698 = vmatmul.mubr.f32.gmra.mxu0 %v851
        %v1699 = vpop.f32.mrf.mxu0
        %v1700 = vadd.f32 %v1555, %v1699
        %v1701 = vpop.f32.mrf.mxu0
        %1702 = vdwg.mxu0
        %1703 = vmatprep.subr.mxu0 0.0
        %1704 = vmatpush1.msra.mxu0 %v1251
        %1705 = vmatprep.subr.mxu0 0.0
        %1706 = vmatpush1.msra.mxu0 %v1250
        %1707 = vmatprep.subr.mxu0 0.0
        %1708 = vmatpush1.msra.mxu0 %v1249
        %1709 = vmatprep.subr.mxu0 0.0
        %1710 = vmatpush1.msra.mxu0 %v1248
        %1711 = vmatprep.subr.mxu0 0.0
        %1712 = vmatpush1.msra.mxu0 %v1247
        %1713 = vmatprep.subr.mxu0 0.0
        %1714 = vmatpush1.msra.mxu0 %v1246
        %1715 = vmatprep.subr.mxu0 0.0
        %1716 = vmatpush1.msra.mxu0 %v1245
        %1717 = vmatprep.subr.mxu0 0.0
        %1718 = vmatpush1.msra.mxu0 %v1244
        %1719 = vmatprep.subr.mxu0 0.0
        %1720 = vmatpush1.msra.mxu0 %v1243
        %1721 = vmatprep.subr.mxu0 0.0
        %1722 = vmatpush1.msra.mxu0 %v1242
        %1723 = vmatprep.subr.mxu0 0.0
        %1724 = vmatpush1.msra.mxu0 %v1241
        %1725 = vmatprep.subr.mxu0 0.0
        %1726 = vmatpush1.msra.mxu0 %v1240
        %1727 = vmatprep.subr.mxu0 0.0
        %1728 = vmatpush1.msra.mxu0 %v1239
        %1729 = vmatprep.subr.mxu0 0.0
        %1730 = vmatpush1.msra.mxu0 %v1238
        %1731 = vmatprep.subr.mxu0 0.0
        %1732 = vmatpush1.msra.mxu0 %v1237
        %1733 = vmatprep.subr.mxu0 0.0
        %1734 = vmatpush1.msra.mxu0 %v1236
        %1735 = vmatprep.subr.mxu0 0.0
        %1736 = vmatpush2.msra.mxu0 %v1267
        %1737 = vmatprep.subr.mxu0 0.0
        %1738 = vmatpush2.msra.mxu0 %v1266
        %1739 = vmatprep.subr.mxu0 0.0
        %1740 = vmatpush2.msra.mxu0 %v1265
        %1741 = vmatprep.subr.mxu0 0.0
        %1742 = vmatpush2.msra.mxu0 %v1264
        %1743 = vmatprep.subr.mxu0 0.0
        %1744 = vmatpush2.msra.mxu0 %v1263
        %1745 = vmatprep.subr.mxu0 0.0
        %1746 = vmatpush2.msra.mxu0 %v1262
        %1747 = vmatprep.subr.mxu0 0.0
        %1748 = vmatpush2.msra.mxu0 %v1261
        %1749 = vmatprep.subr.mxu0 0.0
        %1750 = vmatpush2.msra.mxu0 %v1260
        %1751 = vmatprep.subr.mxu0 0.0
        %1752 = vmatpush2.msra.mxu0 %v1259
        %1753 = vmatprep.subr.mxu0 0.0
        %1754 = vmatpush2.msra.mxu0 %v1258
        %1755 = vmatprep.subr.mxu0 0.0
        %1756 = vmatpush2.msra.mxu0 %v1257
        %1757 = vmatprep.subr.mxu0 0.0
        %1758 = vmatpush2.msra.mxu0 %v1256
        %1759 = vmatprep.subr.mxu0 0.0
        %1760 = vmatpush2.msra.mxu0 %v1255
        %1761 = vmatprep.subr.mxu0 0.0
        %1762 = vmatpush2.msra.mxu0 %v1254
        %1763 = vmatprep.subr.mxu0 0.0
        %1764 = vmatpush2.msra.mxu0 %v1253
        %1765 = vmatprep.subr.mxu0 0.0
        %1766 = vmatpush2.msra.mxu0 %v1252
        %1767 = vmatprep.mubr.f32.mxu0 %v1124
        %1768 = vmatmul.mubr.f32.gmra.mxu0 %v1028
        %v1769 = vpop.f32.mrf.mxu0
        %v1770 = vadd.f32 %v1625, %v1769
        %v1771 = vpop.f32.mrf.mxu0
        %1772 = vmatprep.mubr.f32.mxu0 %v1125
        %1773 = vmatmul.mubr.f32.gmra.mxu0 %v1029
        %v1774 = vpop.f32.mrf.mxu0
        %v1775 = vadd.f32 %v1630, %v1774
        %v1776 = vpop.f32.mrf.mxu0
        %1777 = vmatprep.mubr.f32.mxu0 %v1126
        %1778 = vmatmul.mubr.f32.gmra.mxu0 %v1030
        %v1779 = vpop.f32.mrf.mxu0
        %v1780 = vadd.f32 %v1635, %v1779
        %v1781 = vpop.f32.mrf.mxu0
        %1782 = vmatprep.mubr.f32.mxu0 %v1127
        %1783 = vmatmul.mubr.f32.gmra.mxu0 %v1031
        %v1784 = vpop.f32.mrf.mxu0
        %v1785 = vadd.f32 %v1640, %v1784
        %v1786 = vpop.f32.mrf.mxu0
        %1787 = vmatprep.mubr.f32.mxu0 %v1128
        %1788 = vmatmul.mubr.f32.gmra.mxu0 %v1032
        %v1789 = vpop.f32.mrf.mxu0
        %v1790 = vadd.f32 %v1645, %v1789
        %v1791 = vpop.f32.mrf.mxu0
        %1792 = vmatprep.mubr.f32.mxu0 %v1129
        %1793 = vmatmul.mubr.f32.gmra.mxu0 %v1033
        %v1794 = vpop.f32.mrf.mxu0
        %v1795 = vadd.f32 %v1650, %v1794
        %v1796 = vpop.f32.mrf.mxu0
        %1797 = vmatprep.mubr.f32.mxu0 %v1130
        %1798 = vmatmul.mubr.f32.gmra.mxu0 %v1034
        %v1799 = vpop.f32.mrf.mxu0
        %v1800 = vadd.f32 %v1655, %v1799
        %v1801 = vpop.f32.mrf.mxu0
        %1802 = vmatprep.mubr.f32.mxu0 %v1131
        %1803 = vmatmul.mubr.f32.gmra.mxu0 %v1035
        %v1804 = vpop.f32.mrf.mxu0
        %v1805 = vadd.f32 %v1660, %v1804
        %v1806 = vpop.f32.mrf.mxu0
        %1807 = vmatprep.mubr.f32.mxu0 %v1132
        %1808 = vmatmul.mubr.f32.gmra.mxu0 %v1036
        %v1809 = vpop.f32.mrf.mxu0
        %v1810 = vadd.f32 %v1665, %v1809
        %v1811 = vpop.f32.mrf.mxu0
        %1812 = vmatprep.mubr.f32.mxu0 %v1133
        %1813 = vmatmul.mubr.f32.gmra.mxu0 %v1037
        %v1814 = vpop.f32.mrf.mxu0
        %v1815 = vadd.f32 %v1670, %v1814
        %v1816 = vpop.f32.mrf.mxu0
        %1817 = vmatprep.mubr.f32.mxu0 %v1134
        %1818 = vmatmul.mubr.f32.gmra.mxu0 %v1038
        %v1819 = vpop.f32.mrf.mxu0
        %v1820 = vadd.f32 %v1675, %v1819
        %v1821 = vpop.f32.mrf.mxu0
        %1822 = vmatprep.mubr.f32.mxu0 %v1135
        %1823 = vmatmul.mubr.f32.gmra.mxu0 %v1039
        %v1824 = vpop.f32.mrf.mxu0
        %v1825 = vadd.f32 %v1680, %v1824
        %v1826 = vpop.f32.mrf.mxu0
        %1827 = vmatprep.mubr.f32.mxu0 %v1136
        %1828 = vmatmul.mubr.f32.gmra.mxu0 %v1040
        %v1829 = vpop.f32.mrf.mxu0
        %v1830 = vadd.f32 %v1685, %v1829
        %v1831 = vpop.f32.mrf.mxu0
        %1832 = vmatprep.mubr.f32.mxu0 %v1137
        %1833 = vmatmul.mubr.f32.gmra.mxu0 %v1041
        %v1834 = vpop.f32.mrf.mxu0
        %v1835 = vadd.f32 %v1690, %v1834
        %v1836 = vpop.f32.mrf.mxu0
        %1837 = vmatprep.mubr.f32.mxu0 %v1138
        %1838 = vmatmul.mubr.f32.gmra.mxu0 %v1042
        %v1839 = vpop.f32.mrf.mxu0
        %v1840 = vadd.f32 %v1695, %v1839
        %v1841 = vpop.f32.mrf.mxu0
        %1842 = vmatprep.mubr.f32.mxu0 %v1139
        %1843 = vmatmul.mubr.f32.gmra.mxu0 %v1043
        %v1844 = vpop.f32.mrf.mxu0
        %v1845 = vadd.f32 %v1700, %v1844
        %v1846 = vpop.f32.mrf.mxu0
        %1847 = vdwg.mxu0
        %1848 = vst [vmem:[%s180] sm:$0xff] %v1770
        %1849 = vst [vmem:[%s180 + $0x8] sm:$0xff] %v1775
        %1850 = vst [vmem:[%s180 + $0x10] sm:$0xff] %v1780
        %1851 = vst [vmem:[%s180 + $0x18] sm:$0xff] %v1785
        %1852 = vst [vmem:[%s180 + $0x20] sm:$0xff] %v1790
        %1853 = vst [vmem:[%s180 + $0x28] sm:$0xff] %v1795
        %1854 = vst [vmem:[%s180 + $0x30] sm:$0xff] %v1800
        %1855 = vst [vmem:[%s180 + $0x38] sm:$0xff] %v1805
        %1856 = vst [vmem:[%s180 + $0x40] sm:$0xff] %v1810
        %1857 = vst [vmem:[%s180 + $0x48] sm:$0xff] %v1815
        %1858 = vst [vmem:[%s180 + $0x50] sm:$0xff] %v1820
        %1859 = vst [vmem:[%s180 + $0x58] sm:$0xff] %v1825
        %1860 = vst [vmem:[%s180 + $0x60] sm:$0xff] %v1830
        %1861 = vst [vmem:[%s180 + $0x68] sm:$0xff] %v1835
        %1862 = vst [vmem:[%s180 + $0x70] sm:$0xff] %v1840
        %1863 = vst [vmem:[%s180 + $0x78] sm:$0xff] %v1845
        %s1864 = sand.u32 %s98, 1
        %s1865 = scalar_lea.sflag [#allocation3], %s1864
        %s1866 = sand.u32 %s98, 1
        %s1867 = smul.addr %s1866, 128
        %s1868 = scalar_lea.vmem [#allocation2], %s1867
        // Predicated region
        $region33: #{tpu_custom_call.1} parent=31 // pred_check
          %p1869 = pneg %p108
        $region34: #{tpu_custom_call.1} parent=31 // pred_check_branch
          %1871 = sbr.rel (%p1869) target = $region36
        $region35: #{tpu_custom_call.1} parent=31 // pred_region
          %s1872 = smul.u32 16, %s17
          %s1874 = ssub.s32 2048, 2048
          %1875 = vsyncadd %s1865, %s1874
          %s1876 = smul.addr %s1872, 128
          %s1877 = scalar_lea.hbm %s3, %s1876
          %s1878 = sshll.u32 %s1868, 4
          %s1879 = int_to_ptr.vmem [resolvable:$true] %s1878
          %1884 = dma.vmem_to_hbm [thread:$0]  %s1879, 2048, %s1877, %s1865, 128, 128, 8
        $region36: #{tpu_custom_call.1} parent=31 // pred_fallthru
          _
      $region32: #{tpu_custom_call.1} parent=5 // pred_fallthru
        _
      %p1885 = scmp.le.s32.totalorder 2, %s12
      // Predicated region
      $region37: #{tpu_custom_call.1} parent=5 // pred_check
        %p1886 = pneg %p1885
      $region38: #{tpu_custom_call.1} parent=5 // pred_check_branch
        %1888 = sbr.rel (%p1886) target = $region40
      $region39: #{tpu_custom_call.1} parent=5 // pred_region
        %s1889 = ssub.s32 %s12, 2
        // Predicated region
        $region41: #{tpu_custom_call.1} parent=39 // pred_check
          %p1890 = pneg %p114
        $region42: #{tpu_custom_call.1} parent=39 // pred_check_branch
          %1892 = sbr.rel (%p1890) target = $region44
        $region43: #{tpu_custom_call.1} parent=39 // pred_region
          %s1893 = sand.u32 %s99, 1
          %s1894 = scalar_lea.sflag [#allocation3], %s1893
          %s1895 = sand.u32 %s99, 1
          %s1896 = smul.addr %s1895, 128
          %s1897 = scalar_lea.vmem [#allocation2], %s1896
          %1898 = dma.done %s1894, 2048
        $region44: #{tpu_custom_call.1} parent=39 // pred_fallthru
          _
      $region40: #{tpu_custom_call.1} parent=5 // pred_fallthru
        _
    $region6: #{tpu_custom_call.1} parent=1 // loop_footer
      %s16 = sadd.s32 1, %s12
    $region7: #{tpu_custom_call.1} parent=1 // loop_footer_branch
      %11 = sbr.rel target = $region3
    $region8: #{tpu_custom_call.1} parent=1 // loop_exit
      _
    %1899 = vsyncpa [#allocation3], 1
    %s1900 = scalar_lea.sflag [#allocation3], 1
    %1901 = vsyncpa %s1900, 1

</llo_original>
